<compile_context>
chip_gen: v7x
topology: tpu7x:2x2x1
jax: 0.10.0
libtpu: 0.0.40
codegen_flags: <defaults>
</compile_context>

<pallas_src>
import jax
import jax.numpy as jnp
from jax.experimental import pallas as pl
from jax.experimental.pallas import tpu as pltpu


# PyTorch LSTM gate order is [i, f, g, o]; fused kernel layout is [i, f, o, g]
# so that one sigmoid covers the first three blocks and tanh only the last.
_GATE_ORDER = (0, 1, 3, 2)


def _bilstm_pool_fc_kernel(xg_ref, whh_ref, wfc_ref, bfc_ref, out_ref):
    """Fused bidirectional LSTM recurrence + mean pool + FC.

    xg_ref : (T, Bt, 4*Hp2) bf16 -- precomputed x@W_ih + b per step, gate-major
             [i | f | o | g]; each block is Hp2=128 lanes: [fwd H | bwd H | 0].
    whh_ref: (Hp2, 4*Hp2)   bf16 -- block-diagonal fused hidden->hidden weights.
    wfc_ref: (Hp2, 128)     f32  -- final linear weight (lane/row padded).
    bfc_ref: (1, 128)       f32  -- final linear bias (lane padded).
    out_ref: (Bt, 128)      f32  -- padded logits.
    """
    T = xg_ref.shape[0]
    Bt = xg_ref.shape[1]
    Hp2 = whh_ref.shape[0]  # padded state width: [h_fwd(H) | h_bwd(H) | zeros]

    whh = whh_ref[...]  # hoisted: loaded once, reused for all T steps

    # State is loop-carried in vregs; T is small & static so the Python loop is
    # fully unrolled and the LLO scheduler can interleave MXU/EUP/VPU work.
    h = jnp.zeros((Bt, Hp2), jnp.float32)
    c = jnp.zeros((Bt, Hp2), jnp.float32)
    hsum = jnp.zeros((Bt, Hp2), jnp.float32)

    # TODO(synk): holding whh in MXU weight regs across steps via
    # pltpu.matmul_push_rhs/matmul_acc_lhs would avoid re-streaming the RHS;
    # kept as a plain jnp.dot for portability/correctness.
    for t in range(T):
        # One fused MXU matmul per step covers both directions (bf16 operands,
        # f32 accumulation).
        gates = xg_ref[t].astype(jnp.float32) + jnp.dot(
            h.astype(jnp.bfloat16), whh, preferred_element_type=jnp.float32
        )  # (Bt, 4*Hp2); 128-lane-aligned blocks [i | f | o | g]

        sg = jax.nn.sigmoid(gates[:, : 3 * Hp2])  # i, f, o in one EUP pass
        i = sg[:, 0 * Hp2:1 * Hp2]
        f = sg[:, 1 * Hp2:2 * Hp2]
        o = sg[:, 2 * Hp2:3 * Hp2]
        g = jnp.tanh(gates[:, 3 * Hp2:4 * Hp2])   # tanh only on the g block

        c = f * c + i * g
        h = o * jnp.tanh(c)
        hsum = hsum + h                           # mean-pool accumulator

    pooled = hsum * jnp.float32(1.0 / T)          # (Bt, Hp2) = [mean h_f | mean h_b | 0]
    # TODO(synk): Dropout is identity in eval mode; training-mode masking not implemented.
    out_ref[...] = (
        jnp.dot(pooled, wfc_ref[...], preferred_element_type=jnp.float32)
        + bfc_ref[...]
    )


def init_params(key, vocab_size, embedding_dim, hidden_dim, num_classes=10):
    keys = jax.random.split(key, 9)
    H = hidden_dim
    E = embedding_dim
    s = 0.1

    def rnd(k, shape):
        return jax.random.normal(k, shape, dtype=jnp.float32) * s

    return {
        # frozen embedding table (original script uses a preloaded matrix)
        "embedding": rnd(keys[0], (vocab_size, E)),
        # forward direction LSTM (PyTorch (4H, in) layout stored transposed)
        "wih_f": rnd(keys[1], (E, 4 * H)),
        "whh_f": rnd(keys[2], (H, 4 * H)),
        "b_f": rnd(keys[3], (1, 4 * H)),   # b_ih + b_hh combined
        # reverse direction LSTM
        "wih_b": rnd(keys[4], (E, 4 * H)),
        "whh_b": rnd(keys[5], (H, 4 * H)),
        "b_b": rnd(keys[6], (1, 4 * H)),
        # final fully connected layer: (2H -> num_classes)
        "w_fc": rnd(keys[7], (2 * H, num_classes)),
        "b_fc": rnd(keys[8], (1, num_classes)),
    }


def genre_lstm_forward(token_ids, params, hidden_dim):
    B, T = token_ids.shape
    H = hidden_dim
    num_classes = params["w_fc"].shape[1]

    LANE = 128
    Hp2 = ((2 * H + LANE - 1) // LANE) * LANE       # padded state width (>= 2H, lane mult.)
    Gw = 4 * Hp2                                    # fused gate width [i | f | o | g]
    C_pad = ((num_classes + LANE - 1) // LANE) * LANE

    # Batch tile: >= 8 sublanes; production batches tile at 256 (fills the MXU
    # M dimension) and shard across TensorCores via the parallel grid axis.
    Bt = 256 if B > 256 else max(8, ((B + 7) // 8) * 8)
    B_pad = ((max(B, 1) + Bt - 1) // Bt) * Bt

    emb = params["embedding"].astype(jnp.float32)

    # --- Fold frozen embedding + input projection + bias into per-token gate
    # tables, built directly in the fused, 128-lane-aligned gate-major layout.
    # Per-batch work is then just two gathers + one add (no concat/transpose of
    # the big activation tensor).
    tab_f = emb @ params["wih_f"] + params["b_f"]   # (V, 4H), PyTorch order [i,f,g,o]
    tab_b = emb @ params["wih_b"] + params["b_b"]
    V = tab_f.shape[0]
    table_f = jnp.zeros((V, Gw), jnp.float32)
    table_b = jnp.zeros((V, Gw), jnp.float32)
    for kf, kp in enumerate(_GATE_ORDER):
        table_f = table_f.at[:, kf * Hp2:kf * Hp2 + H].set(tab_f[:, kp * H:(kp + 1) * H])
        table_b = table_b.at[:, kf * Hp2 + H:kf * Hp2 + 2 * H].set(tab_b[:, kp * H:(kp + 1) * H])

    ids_t = token_ids.T                             # (T, B), tiny time-major transpose
    # Backward direction processes tokens in reversed time; mean pooling is
    # permutation-invariant so no re-reversal of its hidden states is needed.
    xg = jnp.take(table_f, ids_t, axis=0) + jnp.take(table_b, ids_t[::-1, :], axis=0)
    xg = jnp.pad(xg, ((0, 0), (0, B_pad - B), (0, 0))).astype(jnp.bfloat16)  # (T, B_pad, Gw)

    # --- Block-diagonal fused hidden->hidden weights in the same fused layout.
    whh = jnp.zeros((Hp2, Gw), jnp.float32)
    for kf, kp in enumerate(_GATE_ORDER):
        whh = whh.at[0:H, kf * Hp2:kf * Hp2 + H].set(params["whh_f"][:, kp * H:(kp + 1) * H])
        whh = whh.at[H:2 * H, kf * Hp2 + H:kf * Hp2 + 2 * H].set(params["whh_b"][:, kp * H:(kp + 1) * H])
    whh = whh.astype(jnp.bfloat16)

    # --- Lane-dense padded FC weights.
    w_fc = jnp.zeros((Hp2, C_pad), jnp.float32).at[:2 * H, :num_classes].set(params["w_fc"])
    b_fc = jnp.zeros((1, C_pad), jnp.float32).at[:, :num_classes].set(params["b_fc"])

    out = pl.pallas_call(
        _bilstm_pool_fc_kernel,
        out_shape=jax.ShapeDtypeStruct((B_pad, C_pad), jnp.float32),
        grid=(B_pad // Bt,),
        in_specs=[
            pl.BlockSpec((T, Bt, Gw), lambda b: (0, b, 0)),     # batch-tiled activations
            pl.BlockSpec((Hp2, Gw), lambda b: (0, 0)),          # replicated weights
            pl.BlockSpec((Hp2, C_pad), lambda b: (0, 0)),
            pl.BlockSpec((1, C_pad), lambda b: (0, 0)),
        ],
        out_specs=pl.BlockSpec((Bt, C_pad), lambda b: (b, 0)),
        compiler_params=pltpu.CompilerParams(
            dimension_semantics=("parallel",),  # shard batch tiles across v7x's 2 TCs
            vmem_limit_bytes=32 << 20,          # fits v7x's 64 MiB physical VMEM
        ),
    )(xg, whh, w_fc, b_fc)

    return out[:B, :num_classes]


def genre_lstm_reference(token_ids, params, hidden_dim):
    """Pure-JAX reference mirroring PyTorch nn.LSTM(bidirectional) semantics."""
    H = hidden_dim
    emb = jnp.take(params["embedding"], token_ids, axis=0)  # (B, T, E)
    B, T, _ = emb.shape

    def run_dir(xs, wih, whh, b):
        h = jnp.zeros((B, H), jnp.float32)
        c = jnp.zeros((B, H), jnp.float32)
        outs = []
        for t in range(T):
            gates = xs[:, t, :] @ wih + h @ whh + b
            i = jax.nn.sigmoid(gates[:, 0 * H:1 * H])
            f = jax.nn.sigmoid(gates[:, 1 * H:2 * H])
            g = jnp.tanh(gates[:, 2 * H:3 * H])
            o = jax.nn.sigmoid(gates[:, 3 * H:4 * H])
            c = f * c + i * g
            h = o * jnp.tanh(c)
            outs.append(h)
        return jnp.stack(outs, axis=1)  # (B, T, H)

    out_f = run_dir(emb, params["wih_f"], params["whh_f"], params["b_f"])
    out_b = run_dir(emb[:, ::-1, :], params["wih_b"], params["whh_b"], params["b_b"])
    out_b = out_b[:, ::-1, :]
    lstm_out = jnp.concatenate([out_f, out_b], axis=-1)  # (B, T, 2H)
    pooled = jnp.mean(lstm_out, axis=1)                  # (B, 2H)
    return pooled @ params["w_fc"] + params["b_fc"]


if __name__ == "__main__":
    key = jax.random.PRNGKey(0)
    k_params, k_tokens = jax.random.split(key)

    vocab_size = 50
    embedding_dim = 100   # matches the module's embedding_dim
    hidden_dim = 32       # small hidden size consistent with the module
    B, T = 2, 8

    params = init_params(k_params, vocab_size, embedding_dim, hidden_dim)
    token_ids = jax.random.randint(k_tokens, (B, T), 0, vocab_size, dtype=jnp.int32)

    out = genre_lstm_forward(token_ids, params, hidden_dim)
    out = jax.block_until_ready(out)

    ref = genre_lstm_reference(token_ids, params, hidden_dim)
    assert out.shape == (B, 10)
    # Recurrence uses bf16 MXU operands (f32 accumulation) per the perf review,
    # so compare at a bf16-appropriate tolerance.
    assert jnp.allclose(out, ref, rtol=5e-3, atol=5e-3), "mismatch vs reference"

    print("KERNEL_OK")
</pallas_src>

<mosaic_0001>
module attributes {stable_mosaic.version = 11 : i64} {
  func.func @_bilstm_pool_fc_kernel(%arg0: i32, %arg1: memref<8x8x512xbf16, #tpu.memory_space<vmem>>, %arg2: memref<128x512xbf16, #tpu.memory_space<vmem>>, %arg3: memref<128x128xf32, #tpu.memory_space<vmem>>, %arg4: memref<1x128xf32, #tpu.memory_space<vmem>>, %arg5: memref<8x128xf32, #tpu.memory_space<vmem>>) attributes {dimension_semantics = [#tpu.dimension_semantics<parallel>], iteration_bounds = array<i64: 1>, scalar_prefetch = 0 : i64, scratch_operands = 0 : i64, tpu.core_type = #tpu.core_type<tc>, window_params = [{transform_indices = @transform_0, window_bounds = array<i64: 8, 8, 512>}, {pipeline_mode = #tpu.pipeline_mode<synchronous>, transform_indices = @transform_1, window_bounds = array<i64: 128, 512>}, {pipeline_mode = #tpu.pipeline_mode<synchronous>, transform_indices = @transform_2, window_bounds = array<i64: 128, 128>}, {pipeline_mode = #tpu.pipeline_mode<synchronous>, transform_indices = @transform_3, window_bounds = array<i64: 1, 128>}, {transform_indices = @transform_4, window_bounds = array<i64: 8, 128>}]} {
    %c0 = arith.constant 0 : index
    %c0_0 = arith.constant 0 : index
    %0 = vector.load %arg2[%c0, %c0_0] : memref<128x512xbf16, #tpu.memory_space<vmem>>, vector<128x512xbf16>
    %cst = arith.constant 0.000000e+00 : f32
    %1 = vector.broadcast %cst : f32 to vector<8x128xf32>
    %cst_1 = arith.constant 0.000000e+00 : f32
    %2 = vector.broadcast %cst_1 : f32 to vector<8x128xf32>
    %cst_2 = arith.constant 0.000000e+00 : f32
    %3 = vector.broadcast %cst_2 : f32 to vector<8x128xf32>
    %c0_3 = arith.constant 0 : index
    %c0_4 = arith.constant 0 : index
    %c0_5 = arith.constant 0 : index
    %4 = vector.load %arg1[%c0_3, %c0_4, %c0_5] : memref<8x8x512xbf16, #tpu.memory_space<vmem>>, vector<1x8x512xbf16>
    %5 = vector.shape_cast %4 : vector<1x8x512xbf16> to vector<8x512xbf16>
    %6 = arith.extf %5 : vector<8x512xbf16> to vector<8x512xf32>
    %7 = arith.truncf %1 : vector<8x128xf32> to vector<8x128xbf16>
    %cst_6 = arith.constant dense<0.000000e+00> : vector<8x512xf32>
    %8 = tpu.matmul %7, %0, %cst_6 {dimension_numbers = #tpu.dot_dimension_numbers<[1], [0], [0], [1], [0, 0, 1, 1], [], []>} : vector<8x128xbf16>, vector<128x512xbf16>, vector<8x512xf32> -> vector<8x512xf32>
    %9 = arith.addf %6, %8 : vector<8x512xf32>
    %10 = vector.extract_strided_slice %9 {offsets = [0, 0], sizes = [8, 384], strides = [1, 1]} : vector<8x512xf32> to vector<8x384xf32>
    %11 = arith.negf %10 : vector<8x384xf32>
    %12 = math.exp %11 : vector<8x384xf32>
    %cst_7 = arith.constant 1.000000e+00 : f32
    %13 = vector.broadcast %cst_7 : f32 to vector<8x384xf32>
    %14 = arith.addf %13, %12 : vector<8x384xf32>
    %15 = arith.divf %13, %14 : vector<8x384xf32>
    %16 = vector.extract_strided_slice %15 {offsets = [0, 0], sizes = [8, 128], strides = [1, 1]} : vector<8x384xf32> to vector<8x128xf32>
    %17 = vector.extract_strided_slice %15 {offsets = [0, 128], sizes = [8, 128], strides = [1, 1]} : vector<8x384xf32> to vector<8x128xf32>
    %18 = vector.extract_strided_slice %15 {offsets = [0, 256], sizes = [8, 128], strides = [1, 1]} : vector<8x384xf32> to vector<8x128xf32>
    %19 = vector.extract_strided_slice %9 {offsets = [0, 384], sizes = [8, 128], strides = [1, 1]} : vector<8x512xf32> to vector<8x128xf32>
    %20 = math.tanh %19 : vector<8x128xf32>
    %21 = arith.mulf %17, %2 : vector<8x128xf32>
    %22 = arith.mulf %16, %20 : vector<8x128xf32>
    %23 = arith.addf %21, %22 : vector<8x128xf32>
    %24 = math.tanh %23 : vector<8x128xf32>
    %25 = arith.mulf %18, %24 : vector<8x128xf32>
    %26 = arith.addf %3, %25 : vector<8x128xf32>
    %c1 = arith.constant 1 : index
    %c0_8 = arith.constant 0 : index
    %c0_9 = arith.constant 0 : index
    %27 = vector.load %arg1[%c1, %c0_8, %c0_9] : memref<8x8x512xbf16, #tpu.memory_space<vmem>>, vector<1x8x512xbf16>
    %28 = vector.shape_cast %27 : vector<1x8x512xbf16> to vector<8x512xbf16>
    %29 = arith.extf %28 : vector<8x512xbf16> to vector<8x512xf32>
    %30 = arith.truncf %25 : vector<8x128xf32> to vector<8x128xbf16>
    %cst_10 = arith.constant dense<0.000000e+00> : vector<8x512xf32>
    %31 = tpu.matmul %30, %0, %cst_10 {dimension_numbers = #tpu.dot_dimension_numbers<[1], [0], [0], [1], [0, 0, 1, 1], [], []>} : vector<8x128xbf16>, vector<128x512xbf16>, vector<8x512xf32> -> vector<8x512xf32>
    %32 = arith.addf %29, %31 : vector<8x512xf32>
    %33 = vector.extract_strided_slice %32 {offsets = [0, 0], sizes = [8, 384], strides = [1, 1]} : vector<8x512xf32> to vector<8x384xf32>
    %34 = arith.negf %33 : vector<8x384xf32>
    %35 = math.exp %34 : vector<8x384xf32>
    %cst_11 = arith.constant 1.000000e+00 : f32
    %36 = vector.broadcast %cst_11 : f32 to vector<8x384xf32>
    %37 = arith.addf %36, %35 : vector<8x384xf32>
    %38 = arith.divf %36, %37 : vector<8x384xf32>
    %39 = vector.extract_strided_slice %38 {offsets = [0, 0], sizes = [8, 128], strides = [1, 1]} : vector<8x384xf32> to vector<8x128xf32>
    %40 = vector.extract_strided_slice %38 {offsets = [0, 128], sizes = [8, 128], strides = [1, 1]} : vector<8x384xf32> to vector<8x128xf32>
    %41 = vector.extract_strided_slice %38 {offsets = [0, 256], sizes = [8, 128], strides = [1, 1]} : vector<8x384xf32> to vector<8x128xf32>
    %42 = vector.extract_strided_slice %32 {offsets = [0, 384], sizes = [8, 128], strides = [1, 1]} : vector<8x512xf32> to vector<8x128xf32>
    %43 = math.tanh %42 : vector<8x128xf32>
    %44 = arith.mulf %40, %23 : vector<8x128xf32>
    %45 = arith.mulf %39, %43 : vector<8x128xf32>
    %46 = arith.addf %44, %45 : vector<8x128xf32>
    %47 = math.tanh %46 : vector<8x128xf32>
    %48 = arith.mulf %41, %47 : vector<8x128xf32>
    %49 = arith.addf %26, %48 : vector<8x128xf32>
    %c2 = arith.constant 2 : index
    %c0_12 = arith.constant 0 : index
    %c0_13 = arith.constant 0 : index
    %50 = vector.load %arg1[%c2, %c0_12, %c0_13] : memref<8x8x512xbf16, #tpu.memory_space<vmem>>, vector<1x8x512xbf16>
    %51 = vector.shape_cast %50 : vector<1x8x512xbf16> to vector<8x512xbf16>
    %52 = arith.extf %51 : vector<8x512xbf16> to vector<8x512xf32>
    %53 = arith.truncf %48 : vector<8x128xf32> to vector<8x128xbf16>
    %cst_14 = arith.constant dense<0.000000e+00> : vector<8x512xf32>
    %54 = tpu.matmul %53, %0, %cst_14 {dimension_numbers = #tpu.dot_dimension_numbers<[1], [0], [0], [1], [0, 0, 1, 1], [], []>} : vector<8x128xbf16>, vector<128x512xbf16>, vector<8x512xf32> -> vector<8x512xf32>
    %55 = arith.addf %52, %54 : vector<8x512xf32>
    %56 = vector.extract_strided_slice %55 {offsets = [0, 0], sizes = [8, 384], strides = [1, 1]} : vector<8x512xf32> to vector<8x384xf32>
    %57 = arith.negf %56 : vector<8x384xf32>
    %58 = math.exp %57 : vector<8x384xf32>
    %cst_15 = arith.constant 1.000000e+00 : f32
    %59 = vector.broadcast %cst_15 : f32 to vector<8x384xf32>
    %60 = arith.addf %59, %58 : vector<8x384xf32>
    %61 = arith.divf %59, %60 : vector<8x384xf32>
    %62 = vector.extract_strided_slice %61 {offsets = [0, 0], sizes = [8, 128], strides = [1, 1]} : vector<8x384xf32> to vector<8x128xf32>
    %63 = vector.extract_strided_slice %61 {offsets = [0, 128], sizes = [8, 128], strides = [1, 1]} : vector<8x384xf32> to vector<8x128xf32>
    %64 = vector.extract_strided_slice %61 {offsets = [0, 256], sizes = [8, 128], strides = [1, 1]} : vector<8x384xf32> to vector<8x128xf32>
    %65 = vector.extract_strided_slice %55 {offsets = [0, 384], sizes = [8, 128], strides = [1, 1]} : vector<8x512xf32> to vector<8x128xf32>
    %66 = math.tanh %65 : vector<8x128xf32>
    %67 = arith.mulf %63, %46 : vector<8x128xf32>
    %68 = arith.mulf %62, %66 : vector<8x128xf32>
    %69 = arith.addf %67, %68 : vector<8x128xf32>
    %70 = math.tanh %69 : vector<8x128xf32>
    %71 = arith.mulf %64, %70 : vector<8x128xf32>
    %72 = arith.addf %49, %71 : vector<8x128xf32>
    %c3 = arith.constant 3 : index
    %c0_16 = arith.constant 0 : index
    %c0_17 = arith.constant 0 : index
    %73 = vector.load %arg1[%c3, %c0_16, %c0_17] : memref<8x8x512xbf16, #tpu.memory_space<vmem>>, vector<1x8x512xbf16>
    %74 = vector.shape_cast %73 : vector<1x8x512xbf16> to vector<8x512xbf16>
    %75 = arith.extf %74 : vector<8x512xbf16> to vector<8x512xf32>
    %76 = arith.truncf %71 : vector<8x128xf32> to vector<8x128xbf16>
    %cst_18 = arith.constant dense<0.000000e+00> : vector<8x512xf32>
    %77 = tpu.matmul %76, %0, %cst_18 {dimension_numbers = #tpu.dot_dimension_numbers<[1], [0], [0], [1], [0, 0, 1, 1], [], []>} : vector<8x128xbf16>, vector<128x512xbf16>, vector<8x512xf32> -> vector<8x512xf32>
    %78 = arith.addf %75, %77 : vector<8x512xf32>
    %79 = vector.extract_strided_slice %78 {offsets = [0, 0], sizes = [8, 384], strides = [1, 1]} : vector<8x512xf32> to vector<8x384xf32>
    %80 = arith.negf %79 : vector<8x384xf32>
    %81 = math.exp %80 : vector<8x384xf32>
    %cst_19 = arith.constant 1.000000e+00 : f32
    %82 = vector.broadcast %cst_19 : f32 to vector<8x384xf32>
    %83 = arith.addf %82, %81 : vector<8x384xf32>
    %84 = arith.divf %82, %83 : vector<8x384xf32>
    %85 = vector.extract_strided_slice %84 {offsets = [0, 0], sizes = [8, 128], strides = [1, 1]} : vector<8x384xf32> to vector<8x128xf32>
    %86 = vector.extract_strided_slice %84 {offsets = [0, 128], sizes = [8, 128], strides = [1, 1]} : vector<8x384xf32> to vector<8x128xf32>
    %87 = vector.extract_strided_slice %84 {offsets = [0, 256], sizes = [8, 128], strides = [1, 1]} : vector<8x384xf32> to vector<8x128xf32>
    %88 = vector.extract_strided_slice %78 {offsets = [0, 384], sizes = [8, 128], strides = [1, 1]} : vector<8x512xf32> to vector<8x128xf32>
    %89 = math.tanh %88 : vector<8x128xf32>
    %90 = arith.mulf %86, %69 : vector<8x128xf32>
    %91 = arith.mulf %85, %89 : vector<8x128xf32>
    %92 = arith.addf %90, %91 : vector<8x128xf32>
    %93 = math.tanh %92 : vector<8x128xf32>
    %94 = arith.mulf %87, %93 : vector<8x128xf32>
    %95 = arith.addf %72, %94 : vector<8x128xf32>
    %c4 = arith.constant 4 : index
    %c0_20 = arith.constant 0 : index
    %c0_21 = arith.constant 0 : index
    %96 = vector.load %arg1[%c4, %c0_20, %c0_21] : memref<8x8x512xbf16, #tpu.memory_space<vmem>>, vector<1x8x512xbf16>
    %97 = vector.shape_cast %96 : vector<1x8x512xbf16> to vector<8x512xbf16>
    %98 = arith.extf %97 : vector<8x512xbf16> to vector<8x512xf32>
    %99 = arith.truncf %94 : vector<8x128xf32> to vector<8x128xbf16>
    %cst_22 = arith.constant dense<0.000000e+00> : vector<8x512xf32>
    %100 = tpu.matmul %99, %0, %cst_22 {dimension_numbers = #tpu.dot_dimension_numbers<[1], [0], [0], [1], [0, 0, 1, 1], [], []>} : vector<8x128xbf16>, vector<128x512xbf16>, vector<8x512xf32> -> vector<8x512xf32>
    %101 = arith.addf %98, %100 : vector<8x512xf32>
    %102 = vector.extract_strided_slice %101 {offsets = [0, 0], sizes = [8, 384], strides = [1, 1]} : vector<8x512xf32> to vector<8x384xf32>
    %103 = arith.negf %102 : vector<8x384xf32>
    %104 = math.exp %103 : vector<8x384xf32>
    %cst_23 = arith.constant 1.000000e+00 : f32
    %105 = vector.broadcast %cst_23 : f32 to vector<8x384xf32>
    %106 = arith.addf %105, %104 : vector<8x384xf32>
    %107 = arith.divf %105, %106 : vector<8x384xf32>
    %108 = vector.extract_strided_slice %107 {offsets = [0, 0], sizes = [8, 128], strides = [1, 1]} : vector<8x384xf32> to vector<8x128xf32>
    %109 = vector.extract_strided_slice %107 {offsets = [0, 128], sizes = [8, 128], strides = [1, 1]} : vector<8x384xf32> to vector<8x128xf32>
    %110 = vector.extract_strided_slice %107 {offsets = [0, 256], sizes = [8, 128], strides = [1, 1]} : vector<8x384xf32> to vector<8x128xf32>
    %111 = vector.extract_strided_slice %101 {offsets = [0, 384], sizes = [8, 128], strides = [1, 1]} : vector<8x512xf32> to vector<8x128xf32>
    %112 = math.tanh %111 : vector<8x128xf32>
    %113 = arith.mulf %109, %92 : vector<8x128xf32>
    %114 = arith.mulf %108, %112 : vector<8x128xf32>
    %115 = arith.addf %113, %114 : vector<8x128xf32>
    %116 = math.tanh %115 : vector<8x128xf32>
    %117 = arith.mulf %110, %116 : vector<8x128xf32>
    %118 = arith.addf %95, %117 : vector<8x128xf32>
    %c5 = arith.constant 5 : index
    %c0_24 = arith.constant 0 : index
    %c0_25 = arith.constant 0 : index
    %119 = vector.load %arg1[%c5, %c0_24, %c0_25] : memref<8x8x512xbf16, #tpu.memory_space<vmem>>, vector<1x8x512xbf16>
    %120 = vector.shape_cast %119 : vector<1x8x512xbf16> to vector<8x512xbf16>
    %121 = arith.extf %120 : vector<8x512xbf16> to vector<8x512xf32>
    %122 = arith.truncf %117 : vector<8x128xf32> to vector<8x128xbf16>
    %cst_26 = arith.constant dense<0.000000e+00> : vector<8x512xf32>
    %123 = tpu.matmul %122, %0, %cst_26 {dimension_numbers = #tpu.dot_dimension_numbers<[1], [0], [0], [1], [0, 0, 1, 1], [], []>} : vector<8x128xbf16>, vector<128x512xbf16>, vector<8x512xf32> -> vector<8x512xf32>
    %124 = arith.addf %121, %123 : vector<8x512xf32>
    %125 = vector.extract_strided_slice %124 {offsets = [0, 0], sizes = [8, 384], strides = [1, 1]} : vector<8x512xf32> to vector<8x384xf32>
    %126 = arith.negf %125 : vector<8x384xf32>
    %127 = math.exp %126 : vector<8x384xf32>
    %cst_27 = arith.constant 1.000000e+00 : f32
    %128 = vector.broadcast %cst_27 : f32 to vector<8x384xf32>
    %129 = arith.addf %128, %127 : vector<8x384xf32>
    %130 = arith.divf %128, %129 : vector<8x384xf32>
    %131 = vector.extract_strided_slice %130 {offsets = [0, 0], sizes = [8, 128], strides = [1, 1]} : vector<8x384xf32> to vector<8x128xf32>
    %132 = vector.extract_strided_slice %130 {offsets = [0, 128], sizes = [8, 128], strides = [1, 1]} : vector<8x384xf32> to vector<8x128xf32>
    %133 = vector.extract_strided_slice %130 {offsets = [0, 256], sizes = [8, 128], strides = [1, 1]} : vector<8x384xf32> to vector<8x128xf32>
    %134 = vector.extract_strided_slice %124 {offsets = [0, 384], sizes = [8, 128], strides = [1, 1]} : vector<8x512xf32> to vector<8x128xf32>
    %135 = math.tanh %134 : vector<8x128xf32>
    %136 = arith.mulf %132, %115 : vector<8x128xf32>
    %137 = arith.mulf %131, %135 : vector<8x128xf32>
    %138 = arith.addf %136, %137 : vector<8x128xf32>
    %139 = math.tanh %138 : vector<8x128xf32>
    %140 = arith.mulf %133, %139 : vector<8x128xf32>
    %141 = arith.addf %118, %140 : vector<8x128xf32>
    %c6 = arith.constant 6 : index
    %c0_28 = arith.constant 0 : index
    %c0_29 = arith.constant 0 : index
    %142 = vector.load %arg1[%c6, %c0_28, %c0_29] : memref<8x8x512xbf16, #tpu.memory_space<vmem>>, vector<1x8x512xbf16>
    %143 = vector.shape_cast %142 : vector<1x8x512xbf16> to vector<8x512xbf16>
    %144 = arith.extf %143 : vector<8x512xbf16> to vector<8x512xf32>
    %145 = arith.truncf %140 : vector<8x128xf32> to vector<8x128xbf16>
    %cst_30 = arith.constant dense<0.000000e+00> : vector<8x512xf32>
    %146 = tpu.matmul %145, %0, %cst_30 {dimension_numbers = #tpu.dot_dimension_numbers<[1], [0], [0], [1], [0, 0, 1, 1], [], []>} : vector<8x128xbf16>, vector<128x512xbf16>, vector<8x512xf32> -> vector<8x512xf32>
    %147 = arith.addf %144, %146 : vector<8x512xf32>
    %148 = vector.extract_strided_slice %147 {offsets = [0, 0], sizes = [8, 384], strides = [1, 1]} : vector<8x512xf32> to vector<8x384xf32>
    %149 = arith.negf %148 : vector<8x384xf32>
    %150 = math.exp %149 : vector<8x384xf32>
    %cst_31 = arith.constant 1.000000e+00 : f32
    %151 = vector.broadcast %cst_31 : f32 to vector<8x384xf32>
    %152 = arith.addf %151, %150 : vector<8x384xf32>
    %153 = arith.divf %151, %152 : vector<8x384xf32>
    %154 = vector.extract_strided_slice %153 {offsets = [0, 0], sizes = [8, 128], strides = [1, 1]} : vector<8x384xf32> to vector<8x128xf32>
    %155 = vector.extract_strided_slice %153 {offsets = [0, 128], sizes = [8, 128], strides = [1, 1]} : vector<8x384xf32> to vector<8x128xf32>
    %156 = vector.extract_strided_slice %153 {offsets = [0, 256], sizes = [8, 128], strides = [1, 1]} : vector<8x384xf32> to vector<8x128xf32>
    %157 = vector.extract_strided_slice %147 {offsets = [0, 384], sizes = [8, 128], strides = [1, 1]} : vector<8x512xf32> to vector<8x128xf32>
    %158 = math.tanh %157 : vector<8x128xf32>
    %159 = arith.mulf %155, %138 : vector<8x128xf32>
    %160 = arith.mulf %154, %158 : vector<8x128xf32>
    %161 = arith.addf %159, %160 : vector<8x128xf32>
    %162 = math.tanh %161 : vector<8x128xf32>
    %163 = arith.mulf %156, %162 : vector<8x128xf32>
    %164 = arith.addf %141, %163 : vector<8x128xf32>
    %c7 = arith.constant 7 : index
    %c0_32 = arith.constant 0 : index
    %c0_33 = arith.constant 0 : index
    %165 = vector.load %arg1[%c7, %c0_32, %c0_33] : memref<8x8x512xbf16, #tpu.memory_space<vmem>>, vector<1x8x512xbf16>
    %166 = vector.shape_cast %165 : vector<1x8x512xbf16> to vector<8x512xbf16>
    %167 = arith.extf %166 : vector<8x512xbf16> to vector<8x512xf32>
    %168 = arith.truncf %163 : vector<8x128xf32> to vector<8x128xbf16>
    %cst_34 = arith.constant dense<0.000000e+00> : vector<8x512xf32>
    %169 = tpu.matmul %168, %0, %cst_34 {dimension_numbers = #tpu.dot_dimension_numbers<[1], [0], [0], [1], [0, 0, 1, 1], [], []>} : vector<8x128xbf16>, vector<128x512xbf16>, vector<8x512xf32> -> vector<8x512xf32>
    %170 = arith.addf %167, %169 : vector<8x512xf32>
    %171 = vector.extract_strided_slice %170 {offsets = [0, 0], sizes = [8, 384], strides = [1, 1]} : vector<8x512xf32> to vector<8x384xf32>
    %172 = arith.negf %171 : vector<8x384xf32>
    %173 = math.exp %172 : vector<8x384xf32>
    %cst_35 = arith.constant 1.000000e+00 : f32
    %174 = vector.broadcast %cst_35 : f32 to vector<8x384xf32>
    %175 = arith.addf %174, %173 : vector<8x384xf32>
    %176 = arith.divf %174, %175 : vector<8x384xf32>
    %177 = vector.extract_strided_slice %176 {offsets = [0, 0], sizes = [8, 128], strides = [1, 1]} : vector<8x384xf32> to vector<8x128xf32>
    %178 = vector.extract_strided_slice %176 {offsets = [0, 128], sizes = [8, 128], strides = [1, 1]} : vector<8x384xf32> to vector<8x128xf32>
    %179 = vector.extract_strided_slice %176 {offsets = [0, 256], sizes = [8, 128], strides = [1, 1]} : vector<8x384xf32> to vector<8x128xf32>
    %180 = vector.extract_strided_slice %170 {offsets = [0, 384], sizes = [8, 128], strides = [1, 1]} : vector<8x512xf32> to vector<8x128xf32>
    %181 = math.tanh %180 : vector<8x128xf32>
    %182 = arith.mulf %178, %161 : vector<8x128xf32>
    %183 = arith.mulf %177, %181 : vector<8x128xf32>
    %184 = arith.addf %182, %183 : vector<8x128xf32>
    %185 = math.tanh %184 : vector<8x128xf32>
    %186 = arith.mulf %179, %185 : vector<8x128xf32>
    %187 = arith.addf %164, %186 : vector<8x128xf32>
    %cst_36 = arith.constant 1.250000e-01 : f32
    %188 = vector.broadcast %cst_36 : f32 to vector<8x128xf32>
    %189 = arith.mulf %187, %188 : vector<8x128xf32>
    %c0_37 = arith.constant 0 : index
    %c0_38 = arith.constant 0 : index
    %190 = vector.load %arg3[%c0_37, %c0_38] : memref<128x128xf32, #tpu.memory_space<vmem>>, vector<128x128xf32>
    %cst_39 = arith.constant dense<0.000000e+00> : vector<8x128xf32>
    %191 = tpu.matmul %189, %190, %cst_39 {dimension_numbers = #tpu.dot_dimension_numbers<[1], [0], [0], [1], [0, 0, 1, 1], [], []>} : vector<8x128xf32>, vector<128x128xf32>, vector<8x128xf32> -> vector<8x128xf32>
    %c0_40 = arith.constant 0 : index
    %c0_41 = arith.constant 0 : index
    %192 = vector.load %arg4[%c0_40, %c0_41] : memref<1x128xf32, #tpu.memory_space<vmem>>, vector<1x128xf32>
    %193 = vector.broadcast %192 : vector<1x128xf32> to vector<8x128xf32>
    %194 = arith.addf %191, %193 : vector<8x128xf32>
    %c0_42 = arith.constant 0 : index
    %c0_43 = arith.constant 0 : index
    %195 = vector.load %arg5[%c0_42, %c0_43] : memref<8x128xf32, #tpu.memory_space<vmem>>, vector<8x128xf32>
    tpu.vector_store %arg5[%c0_42, %c0_43], %194 {strides = array<i32>} : memref<8x128xf32, #tpu.memory_space<vmem>>, vector<8x128xf32>,
    return
  }
  func.func @transform_0(%arg0: i32) -> (i32, i32, i32) {
    %c0_i32 = arith.constant 0 : i32
    %c0_i32_0 = arith.constant 0 : i32
    %c0_i32_1 = arith.constant 0 : i32
    return %c0_i32, %arg0, %c0_i32_0 : i32, i32, i32
  }
  func.func @transform_1(%arg0: i32) -> (i32, i32) {
    %c0_i32 = arith.constant 0 : i32
    %c0_i32_0 = arith.constant 0 : i32
    %c0_i32_1 = arith.constant 0 : i32
    return %c0_i32, %c0_i32_0 : i32, i32
  }
  func.func @transform_2(%arg0: i32) -> (i32, i32) {
    %c0_i32 = arith.constant 0 : i32
    %c0_i32_0 = arith.constant 0 : i32
    %c0_i32_1 = arith.constant 0 : i32
    return %c0_i32, %c0_i32_0 : i32, i32
  }
  func.func @transform_3(%arg0: i32) -> (i32, i32) {
    %c0_i32 = arith.constant 0 : i32
    %c0_i32_0 = arith.constant 0 : i32
    %c0_i32_1 = arith.constant 0 : i32
    return %c0_i32, %c0_i32_0 : i32, i32
  }
  func.func @transform_4(%arg0: i32) -> (i32, i32) {
    %c0_i32 = arith.constant 0 : i32
    %c0_i32_0 = arith.constant 0 : i32
    return %arg0, %c0_i32 : i32, i32
  }
}

</mosaic_0001>

<llo_original>
// kernel: tpu_custom_call.1
$region0: #{tpu_custom_call.1}
  #allocation0 [shape = 'u32[]', space=smem, size = 0x4, offset = 0x4, fixed_abs, tag = 'smem constant byte address 0x4 - core index']
  #allocation1 [shape = 'u32[144,128]{1,0:T(1,128)}', space=vmem, size = 0x12000, scoped, tag = 'internal scratch']
  %s0 = inlined_call_operand.hbm [shape: bf16[8,8,512], index: 0, kind: input, shape index: {}]
  %s1 = inlined_call_operand.hbm [shape: bf16[128,512], index: 1, kind: input, shape index: {}]
  %s2 = inlined_call_operand.hbm [shape: f32[128,128], index: 2, kind: input, shape index: {}]
  %s3 = inlined_call_operand.vmem [shape: f32[1,128], index: 3, kind: input, shape index: {}]
  %s4 = inlined_call_operand.hbm [shape: f32[8,128], index: 4, kind: output, shape index: {}]
  %s5 = sld [smem:[#allocation0]]
  $region38: #{tpu_custom_call.1} parent=0
    _
  %s7 = ssub.s32 1, %s5
  %s8 = scalar_select 0, %s7, %s5
  $region1: #{tpu_custom_call.1} parent=0
    #allocation2 [shape = 'u8[65536]{0}', space=vmem, size = 0x10000, scoped, tag = 'input window, operand 0, single buffered']
    #allocation3 [shape = 's32[1]{0}', space=sflag, size = 0x4, scoped, tag = 'scoped memory for tpu_custom_call.1']
    #allocation4 [shape = 's32[1]{0}', space=sflag, size = 0x4, scoped, tag = 'scoped memory for tpu_custom_call.1']
    #allocation5 [shape = 'u8[131072]{0}', space=vmem, size = 0x20000, scoped, tag = 'input window, operand 1, single buffered']
    #allocation6 [shape = 's32[1]{0}', space=sflag, size = 0x4, scoped, tag = 'scoped memory for tpu_custom_call.1']
    #allocation7 [shape = 'u8[65536]{0}', space=vmem, size = 0x10000, scoped, tag = 'input window, operand 2, single buffered']
    #allocation8 [shape = 'u8[4096]{0}', space=vmem, size = 0x1000, scoped, tag = 'output window, operand 0, single buffered']
    %9 = vsyncpa [#allocation3], 0
    %10 = vsyncpa [#allocation6], 0
    %11 = vsyncpa [#allocation4], 0
    // Predicated region
    $region2: #{tpu_custom_call.1} parent=1 // pred_check
      _
    $region3: #{tpu_custom_call.1} parent=1 // pred_check_branch
      %13 = sbr.rel (0) target = $region5
    $region4: #{tpu_custom_call.1} parent=1 // pred_region
      %s15 = ssub.s32 2048, 2048
      %16 = vsyncadd [#allocation3], %s15
      %s17 = sshll.u32 [#allocation2], 4
      %s18 = int_to_ptr.vmem [resolvable:$true] %s17
      %23 = dma.hbm_to_vmem [thread:$0]  %s0, 2048, %s18, [#allocation3], 256, 256, 16
    $region5: #{tpu_custom_call.1} parent=1 // pred_fallthru
      _
    // Predicated region
    $region6: #{tpu_custom_call.1} parent=1 // pred_check
      _
    $region7: #{tpu_custom_call.1} parent=1 // pred_check_branch
      %25 = sbr.rel (0) target = $region9
    $region8: #{tpu_custom_call.1} parent=1 // pred_region
      %s27 = ssub.s32 4096, 4096
      %28 = vsyncadd [#allocation6], %s27
      %s29 = sshll.u32 [#allocation5], 4
      %s30 = int_to_ptr.vmem [resolvable:$true] %s29
      %35 = dma.hbm_to_vmem [thread:$0]  %s1, 4096, %s30, [#allocation6], 256, 256, 16
    $region9: #{tpu_custom_call.1} parent=1 // pred_fallthru
      _
    // Predicated region
    $region10: #{tpu_custom_call.1} parent=1 // pred_check
      _
    $region11: #{tpu_custom_call.1} parent=1 // pred_check_branch
      %37 = sbr.rel (0) target = $region13
    $region12: #{tpu_custom_call.1} parent=1 // pred_region
      %s39 = ssub.s32 2048, 2048
      %40 = vsyncadd [#allocation6], %s39
      %s41 = sshll.u32 [#allocation7], 4
      %s42 = int_to_ptr.vmem [resolvable:$true] %s41
      %47 = dma.hbm_to_vmem [thread:$0]  %s2, 2048, %s42, [#allocation6], 128, 128, 8
    $region13: #{tpu_custom_call.1} parent=1 // pred_fallthru
      _
    // Predicated region
    $region14: #{tpu_custom_call.1} parent=1 // pred_check
      _
    $region15: #{tpu_custom_call.1} parent=1 // pred_check_branch
      %49 = sbr.rel (0) target = $region17
    $region16: #{tpu_custom_call.1} parent=1 // pred_region
      _
    $region17: #{tpu_custom_call.1} parent=1 // pred_fallthru
      _
    // Predicated region
    $region18: #{tpu_custom_call.1} parent=1 // pred_check
      _
    $region19: #{tpu_custom_call.1} parent=1 // pred_check_branch
      %51 = sbr.rel (0) target = $region21
    $region20: #{tpu_custom_call.1} parent=1 // pred_region
      %52 = dma.done [#allocation3], 2048
    $region21: #{tpu_custom_call.1} parent=1 // pred_fallthru
      _
    // Predicated region
    $region22: #{tpu_custom_call.1} parent=1 // pred_check
      _
    $region23: #{tpu_custom_call.1} parent=1 // pred_check_branch
      %54 = sbr.rel (0) target = $region25
    $region24: #{tpu_custom_call.1} parent=1 // pred_region
      %55 = dma.done [#allocation6], 4096
    $region25: #{tpu_custom_call.1} parent=1 // pred_fallthru
      _
    // Predicated region
    $region26: #{tpu_custom_call.1} parent=1 // pred_check
      _
    $region27: #{tpu_custom_call.1} parent=1 // pred_check_branch
      %57 = sbr.rel (0) target = $region29
    $region28: #{tpu_custom_call.1} parent=1 // pred_region
      %58 = dma.done [#allocation6], 2048
    $region29: #{tpu_custom_call.1} parent=1 // pred_fallthru
      _
    %v60 = vld [vmem:[#allocation5] sm:$0xff]
    %v61 = vld [vmem:[#allocation5 + $0x8] sm:$0xff]
    %v62 = vld [vmem:[#allocation5 + $0x10] sm:$0xff]
    %v63 = vld [vmem:[#allocation5 + $0x18] sm:$0xff]
    %v64 = vld [vmem:[#allocation5 + $0x20] sm:$0xff]
    %v65 = vld [vmem:[#allocation5 + $0x28] sm:$0xff]
    %v66 = vld [vmem:[#allocation5 + $0x30] sm:$0xff]
    %v67 = vld [vmem:[#allocation5 + $0x38] sm:$0xff]
    %v68 = vld [vmem:[#allocation5 + $0x40] sm:$0xff]
    %v69 = vld [vmem:[#allocation5 + $0x48] sm:$0xff]
    %v70 = vld [vmem:[#allocation5 + $0x50] sm:$0xff]
    %v71 = vld [vmem:[#allocation5 + $0x58] sm:$0xff]
    %v72 = vld [vmem:[#allocation5 + $0x60] sm:$0xff]
    %v73 = vld [vmem:[#allocation5 + $0x68] sm:$0xff]
    %v74 = vld [vmem:[#allocation5 + $0x70] sm:$0xff]
    %v75 = vld [vmem:[#allocation5 + $0x78] sm:$0xff]
    %v76 = vld [vmem:[#allocation5 + $0x80] sm:$0xff]
    %v77 = vld [vmem:[#allocation5 + $0x88] sm:$0xff]
    %v78 = vld [vmem:[#allocation5 + $0x90] sm:$0xff]
    %v79 = vld [vmem:[#allocation5 + $0x98] sm:$0xff]
    %v80 = vld [vmem:[#allocation5 + $0xa0] sm:$0xff]
    %v81 = vld [vmem:[#allocation5 + $0xa8] sm:$0xff]
    %v82 = vld [vmem:[#allocation5 + $0xb0] sm:$0xff]
    %v83 = vld [vmem:[#allocation5 + $0xb8] sm:$0xff]
    %v84 = vld [vmem:[#allocation5 + $0xc0] sm:$0xff]
    %v85 = vld [vmem:[#allocation5 + $0xc8] sm:$0xff]
    %v86 = vld [vmem:[#allocation5 + $0xd0] sm:$0xff]
    %v87 = vld [vmem:[#allocation5 + $0xd8] sm:$0xff]
    %v88 = vld [vmem:[#allocation5 + $0xe0] sm:$0xff]
    %v89 = vld [vmem:[#allocation5 + $0xe8] sm:$0xff]
    %v90 = vld [vmem:[#allocation5 + $0xf0] sm:$0xff]
    %v91 = vld [vmem:[#allocation5 + $0xf8] sm:$0xff]
    %v92 = vld [vmem:[#allocation2] sm:$0xff]
    %v93 = vld [vmem:[#allocation2 + $0x8] sm:$0xff]
    %v94 = vunpack.c.l.bf16 %v92
    %v95 = vunpack.c.h.bf16 %v92
    %v96 = vunpack.c.l.bf16 %v93
    %v97 = vunpack.c.h.bf16 %v93
    %v130 = vunpack.c.l.b16 %v60
    %v131 = vunpack.c.h.b16 %v60
    %v132 = vunpack.c.l.b16 %v61
    %v133 = vunpack.c.h.b16 %v61
    %v134 = vunpack.c.l.b16 %v62
    %v135 = vunpack.c.h.b16 %v62
    %v136 = vunpack.c.l.b16 %v63
    %v137 = vunpack.c.h.b16 %v63
    %v138 = vunpack.c.l.b16 %v64
    %v139 = vunpack.c.h.b16 %v64
    %v140 = vunpack.c.l.b16 %v65
    %v141 = vunpack.c.h.b16 %v65
    %v142 = vunpack.c.l.b16 %v66
    %v143 = vunpack.c.h.b16 %v66
    %v144 = vunpack.c.l.b16 %v67
    %v145 = vunpack.c.h.b16 %v67
    %v146 = vunpack.c.l.b16 %v68
    %v147 = vunpack.c.h.b16 %v68
    %v148 = vunpack.c.l.b16 %v69
    %v149 = vunpack.c.h.b16 %v69
    %v150 = vunpack.c.l.b16 %v70
    %v151 = vunpack.c.h.b16 %v70
    %v152 = vunpack.c.l.b16 %v71
    %v153 = vunpack.c.h.b16 %v71
    %v154 = vunpack.c.l.b16 %v72
    %v155 = vunpack.c.h.b16 %v72
    %v156 = vunpack.c.l.b16 %v73
    %v157 = vunpack.c.h.b16 %v73
    %v158 = vunpack.c.l.b16 %v74
    %v159 = vunpack.c.h.b16 %v74
    %v160 = vunpack.c.l.b16 %v75
    %v161 = vunpack.c.h.b16 %v75
    %v162 = vunpack.c.l.b16 %v76
    %v163 = vunpack.c.h.b16 %v76
    %v164 = vunpack.c.l.b16 %v77
    %v165 = vunpack.c.h.b16 %v77
    %v166 = vunpack.c.l.b16 %v78
    %v167 = vunpack.c.h.b16 %v78
    %v168 = vunpack.c.l.b16 %v79
    %v169 = vunpack.c.h.b16 %v79
    %v170 = vunpack.c.l.b16 %v80
    %v171 = vunpack.c.h.b16 %v80
    %v172 = vunpack.c.l.b16 %v81
    %v173 = vunpack.c.h.b16 %v81
    %v174 = vunpack.c.l.b16 %v82
    %v175 = vunpack.c.h.b16 %v82
    %v176 = vunpack.c.l.b16 %v83
    %v177 = vunpack.c.h.b16 %v83
    %v178 = vunpack.c.l.b16 %v84
    %v179 = vunpack.c.h.b16 %v84
    %v180 = vunpack.c.l.b16 %v85
    %v181 = vunpack.c.h.b16 %v85
    %v182 = vunpack.c.l.b16 %v86
    %v183 = vunpack.c.h.b16 %v86
    %v184 = vunpack.c.l.b16 %v87
    %v185 = vunpack.c.h.b16 %v87
    %v186 = vunpack.c.l.b16 %v88
    %v187 = vunpack.c.h.b16 %v88
    %v188 = vunpack.c.l.b16 %v89
    %v189 = vunpack.c.h.b16 %v89
    %v190 = vunpack.c.l.b16 %v90
    %v191 = vunpack.c.h.b16 %v90
    %v192 = vunpack.c.l.b16 %v91
    %v193 = vunpack.c.h.b16 %v91
    %v194 = vpack.c.b16 %v134, %v130
    %v195 = vpack.c.b16 %v135, %v131
    %v196 = vpack.c.b16 %v136, %v132
    %v197 = vpack.c.b16 %v137, %v133
    %v198 = vpack.c.b16 %v142, %v138
    %v199 = vpack.c.b16 %v143, %v139
    %v200 = vpack.c.b16 %v144, %v140
    %v201 = vpack.c.b16 %v145, %v141
    %v202 = vpack.c.b16 %v150, %v146
    %v203 = vpack.c.b16 %v151, %v147
    %v204 = vpack.c.b16 %v152, %v148
    %v205 = vpack.c.b16 %v153, %v149
    %v206 = vpack.c.b16 %v158, %v154
    %v207 = vpack.c.b16 %v159, %v155
    %v208 = vpack.c.b16 %v160, %v156
    %v209 = vpack.c.b16 %v161, %v157
    %v210 = vpack.c.b16 %v166, %v162
    %v211 = vpack.c.b16 %v167, %v163
    %v212 = vpack.c.b16 %v168, %v164
    %v213 = vpack.c.b16 %v169, %v165
    %v214 = vpack.c.b16 %v174, %v170
    %v215 = vpack.c.b16 %v175, %v171
    %v216 = vpack.c.b16 %v176, %v172
    %v217 = vpack.c.b16 %v177, %v173
    %v218 = vpack.c.b16 %v182, %v178
    %v219 = vpack.c.b16 %v183, %v179
    %v220 = vpack.c.b16 %v184, %v180
    %v221 = vpack.c.b16 %v185, %v181
    %v222 = vpack.c.b16 %v190, %v186
    %v223 = vpack.c.b16 %v191, %v187
    %v224 = vpack.c.b16 %v192, %v188
    %v225 = vpack.c.b16 %v193, %v189
    %258 = vmatprep.subr.bf16.mxu0 %v195
    %259 = vmatpush1.bf16.msra.mxu0 %v194
    %260 = vmatprep.subr.bf16.mxu0 %v199
    %261 = vmatpush1.bf16.msra.mxu0 %v198
    %262 = vmatprep.subr.bf16.mxu0 %v203
    %263 = vmatpush1.bf16.msra.mxu0 %v202
    %264 = vmatprep.subr.bf16.mxu0 %v207
    %265 = vmatpush1.bf16.msra.mxu0 %v206
    %266 = vmatprep.subr.bf16.mxu0 %v211
    %267 = vmatpush1.bf16.msra.mxu0 %v210
    %268 = vmatprep.subr.bf16.mxu0 %v215
    %269 = vmatpush1.bf16.msra.mxu0 %v214
    %270 = vmatprep.subr.bf16.mxu0 %v219
    %271 = vmatpush1.bf16.msra.mxu0 %v218
    %272 = vmatprep.subr.bf16.mxu0 %v223
    %273 = vmatpush1.bf16.msra.mxu0 %v222
    %274 = vmatprep.subr.bf16.mxu0 0
    %275 = vmatpush1.bf16.msra.mxu0 0
    %276 = vmatprep.subr.bf16.mxu0 0
    %277 = vmatpush1.bf16.msra.mxu0 0
    %278 = vmatprep.subr.bf16.mxu0 0
    %279 = vmatpush1.bf16.msra.mxu0 0
    %280 = vmatprep.subr.bf16.mxu0 0
    %281 = vmatpush1.bf16.msra.mxu0 0
    %282 = vmatprep.subr.bf16.mxu0 0
    %283 = vmatpush1.bf16.msra.mxu0 0
    %284 = vmatprep.subr.bf16.mxu0 0
    %285 = vmatpush1.bf16.msra.mxu0 0
    %286 = vmatprep.subr.bf16.mxu0 0
    %287 = vmatpush1.bf16.msra.mxu0 0
    %288 = vmatprep.subr.bf16.mxu0 0
    %289 = vmatpush1.bf16.msra.mxu0 0
    %290 = vmatprep.mubr.bf16.mxu0 0
    %291 = vmatmul.mubr.bf16.gmra.mrb[0].mxu0 0
    %v292 = vpop.f32.mrb[0].mxu0
    %v293 = vadd.f32 0.0, %v292
    %v294 = vpop.f32.mrb[0].mxu0
    %v295 = vadd.f32 0.0, %v294
    %v296 = vpop.f32.mrb[0].mxu0
    %v297 = vpop.f32.mrb[0].mxu0
    %298 = vdwg.mxu0
    %299 = vmatprep.subr.bf16.mxu0 %v197
    %300 = vmatpush1.bf16.msra.mxu0 %v196
    %301 = vmatprep.subr.bf16.mxu0 %v201
    %302 = vmatpush1.bf16.msra.mxu0 %v200
    %303 = vmatprep.subr.bf16.mxu0 %v205
    %304 = vmatpush1.bf16.msra.mxu0 %v204
    %305 = vmatprep.subr.bf16.mxu0 %v209
    %306 = vmatpush1.bf16.msra.mxu0 %v208
    %307 = vmatprep.subr.bf16.mxu0 %v213
    %308 = vmatpush1.bf16.msra.mxu0 %v212
    %309 = vmatprep.subr.bf16.mxu0 %v217
    %310 = vmatpush1.bf16.msra.mxu0 %v216
    %311 = vmatprep.subr.bf16.mxu0 %v221
    %312 = vmatpush1.bf16.msra.mxu0 %v220
    %313 = vmatprep.subr.bf16.mxu0 %v225
    %314 = vmatpush1.bf16.msra.mxu0 %v224
    %315 = vmatprep.subr.bf16.mxu0 0
    %316 = vmatpush1.bf16.msra.mxu0 0
    %317 = vmatprep.subr.bf16.mxu0 0
    %318 = vmatpush1.bf16.msra.mxu0 0
    %319 = vmatprep.subr.bf16.mxu0 0
    %320 = vmatpush1.bf16.msra.mxu0 0
    %321 = vmatprep.subr.bf16.mxu0 0
    %322 = vmatpush1.bf16.msra.mxu0 0
    %323 = vmatprep.subr.bf16.mxu0 0
    %324 = vmatpush1.bf16.msra.mxu0 0
    %325 = vmatprep.subr.bf16.mxu0 0
    %326 = vmatpush1.bf16.msra.mxu0 0
    %327 = vmatprep.subr.bf16.mxu0 0
    %328 = vmatpush1.bf16.msra.mxu0 0
    %329 = vmatprep.subr.bf16.mxu0 0
    %330 = vmatpush1.bf16.msra.mxu0 0
    %331 = vmatprep.mubr.bf16.mxu0 0
    %332 = vmatmul.mubr.bf16.gmra.mrb[0].mxu0 0
    %v333 = vpop.f32.mrb[0].mxu0
    %v334 = vadd.f32 0.0, %v333
    %v335 = vpop.f32.mrb[0].mxu0
    %v336 = vadd.f32 0.0, %v335
    %v337 = vpop.f32.mrb[0].mxu0
    %v338 = vpop.f32.mrb[0].mxu0
    %339 = vdwg.mxu0
    %v340 = vadd.f32 %v94, %v293
    %v341 = vadd.f32 %v95, %v295
    %v342 = vadd.f32 %v96, %v334
    %v343 = vadd.f32 %v97, %v336
    %v344 = vxor.u32 %v340, 2147483648
    %v345 = vxor.u32 %v341, 2147483648
    %v346 = vxor.u32 %v342, 2147483648
    %v347 = vmul.f32 %v344, 1.442695
    %v348 = vpow.pop %v347
    %v349 = vmul.f32 %v345, 1.442695
    %v350 = vpow.pop %v349
    %v351 = vmul.f32 %v346, 1.442695
    %v352 = vpow.pop %v351
    %v353 = vadd.f32 %v348, 1.0
    %v354 = vadd.f32 %v350, 1.0
    %v355 = vadd.f32 %v352, 1.0
    %v356 = vrcp.pop %v353
    %v357 = vmul.f32 1.0, %v356
    %v358 = vrcp.pop %v354
    %v359 = vmul.f32 1.0, %v358
    %v360 = vrcp.pop %v355
    %v361 = vmul.f32 1.0, %v360
    %v362 = vtanh.pop %v343
    %v363 = vmul.f32 %v359, 0.0
    %v364 = vmul.f32 %v357, %v362
    %v365 = vadd.f32 %v363, %v364
    %v366 = vtanh.pop %v365
    %v367 = vmul.f32 %v361, %v366
    %v368 = vadd.f32 %v367, 0.0
    %s369 = scalar_lea.vmem [#allocation2], 16
    %v370 = vld [vmem:[%s369] sm:$0xff]
    %v371 = vld [vmem:[%s369 + $0x8] sm:$0xff]
    %v372 = vunpack.c.l.bf16 %v370
    %v373 = vunpack.c.h.bf16 %v370
    %v374 = vunpack.c.l.bf16 %v371
    %v375 = vunpack.c.h.bf16 %v371
    %v376 = vpack.c.bf16 %v367, %v367
    %377 = vmatprep.subr.bf16.mxu0 %v195
    %378 = vmatpush1.bf16.msra.mxu0 %v194
    %379 = vmatprep.subr.bf16.mxu0 %v199
    %380 = vmatpush1.bf16.msra.mxu0 %v198
    %381 = vmatprep.subr.bf16.mxu0 %v203
    %382 = vmatpush1.bf16.msra.mxu0 %v202
    %383 = vmatprep.subr.bf16.mxu0 %v207
    %384 = vmatpush1.bf16.msra.mxu0 %v206
    %385 = vmatprep.subr.bf16.mxu0 %v211
    %386 = vmatpush1.bf16.msra.mxu0 %v210
    %387 = vmatprep.subr.bf16.mxu0 %v215
    %388 = vmatpush1.bf16.msra.mxu0 %v214
    %389 = vmatprep.subr.bf16.mxu0 %v219
    %390 = vmatpush1.bf16.msra.mxu0 %v218
    %391 = vmatprep.subr.bf16.mxu0 %v223
    %392 = vmatpush1.bf16.msra.mxu0 %v222
    %393 = vmatprep.subr.bf16.mxu0 0
    %394 = vmatpush1.bf16.msra.mxu0 0
    %395 = vmatprep.subr.bf16.mxu0 0
    %396 = vmatpush1.bf16.msra.mxu0 0
    %397 = vmatprep.subr.bf16.mxu0 0
    %398 = vmatpush1.bf16.msra.mxu0 0
    %399 = vmatprep.subr.bf16.mxu0 0
    %400 = vmatpush1.bf16.msra.mxu0 0
    %401 = vmatprep.subr.bf16.mxu0 0
    %402 = vmatpush1.bf16.msra.mxu0 0
    %403 = vmatprep.subr.bf16.mxu0 0
    %404 = vmatpush1.bf16.msra.mxu0 0
    %405 = vmatprep.subr.bf16.mxu0 0
    %406 = vmatpush1.bf16.msra.mxu0 0
    %407 = vmatprep.subr.bf16.mxu0 0
    %408 = vmatpush1.bf16.msra.mxu0 0
    %409 = vmatprep.mubr.bf16.mxu0 0
    %410 = vmatmul.mubr.bf16.gmra.mrb[0].mxu0 %v376
    %v411 = vpop.f32.mrb[0].mxu0
    %v412 = vadd.f32 0.0, %v411
    %v413 = vpop.f32.mrb[0].mxu0
    %v414 = vadd.f32 0.0, %v413
    %v415 = vpop.f32.mrb[0].mxu0
    %v416 = vpop.f32.mrb[0].mxu0
    %417 = vdwg.mxu0
    %418 = vmatprep.subr.bf16.mxu0 %v197
    %419 = vmatpush1.bf16.msra.mxu0 %v196
    %420 = vmatprep.subr.bf16.mxu0 %v201
    %421 = vmatpush1.bf16.msra.mxu0 %v200
    %422 = vmatprep.subr.bf16.mxu0 %v205
    %423 = vmatpush1.bf16.msra.mxu0 %v204
    %424 = vmatprep.subr.bf16.mxu0 %v209
    %425 = vmatpush1.bf16.msra.mxu0 %v208
    %426 = vmatprep.subr.bf16.mxu0 %v213
    %427 = vmatpush1.bf16.msra.mxu0 %v212
    %428 = vmatprep.subr.bf16.mxu0 %v217
    %429 = vmatpush1.bf16.msra.mxu0 %v216
    %430 = vmatprep.subr.bf16.mxu0 %v221
    %431 = vmatpush1.bf16.msra.mxu0 %v220
    %432 = vmatprep.subr.bf16.mxu0 %v225
    %433 = vmatpush1.bf16.msra.mxu0 %v224
    %434 = vmatprep.subr.bf16.mxu0 0
    %435 = vmatpush1.bf16.msra.mxu0 0
    %436 = vmatprep.subr.bf16.mxu0 0
    %437 = vmatpush1.bf16.msra.mxu0 0
    %438 = vmatprep.subr.bf16.mxu0 0
    %439 = vmatpush1.bf16.msra.mxu0 0
    %440 = vmatprep.subr.bf16.mxu0 0
    %441 = vmatpush1.bf16.msra.mxu0 0
    %442 = vmatprep.subr.bf16.mxu0 0
    %443 = vmatpush1.bf16.msra.mxu0 0
    %444 = vmatprep.subr.bf16.mxu0 0
    %445 = vmatpush1.bf16.msra.mxu0 0
    %446 = vmatprep.subr.bf16.mxu0 0
    %447 = vmatpush1.bf16.msra.mxu0 0
    %448 = vmatprep.subr.bf16.mxu0 0
    %449 = vmatpush1.bf16.msra.mxu0 0
    %450 = vmatprep.mubr.bf16.mxu0 0
    %451 = vmatmul.mubr.bf16.gmra.mrb[0].mxu0 %v376
    %v452 = vpop.f32.mrb[0].mxu0
    %v453 = vadd.f32 0.0, %v452
    %v454 = vpop.f32.mrb[0].mxu0
    %v455 = vadd.f32 0.0, %v454
    %v456 = vpop.f32.mrb[0].mxu0
    %v457 = vpop.f32.mrb[0].mxu0
    %458 = vdwg.mxu0
    %v459 = vadd.f32 %v372, %v412
    %v460 = vadd.f32 %v373, %v414
    %v461 = vadd.f32 %v374, %v453
    %v462 = vadd.f32 %v375, %v455
    %v463 = vxor.u32 %v459, 2147483648
    %v464 = vxor.u32 %v460, 2147483648
    %v465 = vxor.u32 %v461, 2147483648
    %v466 = vmul.f32 %v463, 1.442695
    %v467 = vpow.pop %v466
    %v468 = vmul.f32 %v464, 1.442695
    %v469 = vpow.pop %v468
    %v470 = vmul.f32 %v465, 1.442695
    %v471 = vpow.pop %v470
    %v472 = vadd.f32 %v467, 1.0
    %v473 = vadd.f32 %v469, 1.0
    %v474 = vadd.f32 %v471, 1.0
    %v475 = vrcp.pop %v472
    %v476 = vmul.f32 1.0, %v475
    %v477 = vrcp.pop %v473
    %v478 = vmul.f32 1.0, %v477
    %v479 = vrcp.pop %v474
    %v480 = vmul.f32 1.0, %v479
    %v481 = vtanh.pop %v462
    %v482 = vmul.f32 %v478, %v365
    %v483 = vmul.f32 %v476, %v481
    %v484 = vadd.f32 %v482, %v483
    %v485 = vtanh.pop %v484
    %v486 = vmul.f32 %v480, %v485
    %v487 = vadd.f32 %v368, %v486
    %s488 = scalar_lea.vmem [#allocation2], 32
    %v489 = vld [vmem:[%s488] sm:$0xff]
    %v490 = vld [vmem:[%s488 + $0x8] sm:$0xff]
    %v491 = vunpack.c.l.bf16 %v489
    %v492 = vunpack.c.h.bf16 %v489
    %v493 = vunpack.c.l.bf16 %v490
    %v494 = vunpack.c.h.bf16 %v490
    %v495 = vpack.c.bf16 %v486, %v486
    %496 = vmatprep.subr.bf16.mxu0 %v195
    %497 = vmatpush1.bf16.msra.mxu0 %v194
    %498 = vmatprep.subr.bf16.mxu0 %v199
    %499 = vmatpush1.bf16.msra.mxu0 %v198
    %500 = vmatprep.subr.bf16.mxu0 %v203
    %501 = vmatpush1.bf16.msra.mxu0 %v202
    %502 = vmatprep.subr.bf16.mxu0 %v207
    %503 = vmatpush1.bf16.msra.mxu0 %v206
    %504 = vmatprep.subr.bf16.mxu0 %v211
    %505 = vmatpush1.bf16.msra.mxu0 %v210
    %506 = vmatprep.subr.bf16.mxu0 %v215
    %507 = vmatpush1.bf16.msra.mxu0 %v214
    %508 = vmatprep.subr.bf16.mxu0 %v219
    %509 = vmatpush1.bf16.msra.mxu0 %v218
    %510 = vmatprep.subr.bf16.mxu0 %v223
    %511 = vmatpush1.bf16.msra.mxu0 %v222
    %512 = vmatprep.subr.bf16.mxu0 0
    %513 = vmatpush1.bf16.msra.mxu0 0
    %514 = vmatprep.subr.bf16.mxu0 0
    %515 = vmatpush1.bf16.msra.mxu0 0
    %516 = vmatprep.subr.bf16.mxu0 0
    %517 = vmatpush1.bf16.msra.mxu0 0
    %518 = vmatprep.subr.bf16.mxu0 0
    %519 = vmatpush1.bf16.msra.mxu0 0
    %520 = vmatprep.subr.bf16.mxu0 0
    %521 = vmatpush1.bf16.msra.mxu0 0
    %522 = vmatprep.subr.bf16.mxu0 0
    %523 = vmatpush1.bf16.msra.mxu0 0
    %524 = vmatprep.subr.bf16.mxu0 0
    %525 = vmatpush1.bf16.msra.mxu0 0
    %526 = vmatprep.subr.bf16.mxu0 0
    %527 = vmatpush1.bf16.msra.mxu0 0
    %528 = vmatprep.mubr.bf16.mxu0 0
    %529 = vmatmul.mubr.bf16.gmra.mrb[0].mxu0 %v495
    %v530 = vpop.f32.mrb[0].mxu0
    %v531 = vadd.f32 0.0, %v530
    %v532 = vpop.f32.mrb[0].mxu0
    %v533 = vadd.f32 0.0, %v532
    %v534 = vpop.f32.mrb[0].mxu0
    %v535 = vpop.f32.mrb[0].mxu0
    %536 = vdwg.mxu0
    %537 = vmatprep.subr.bf16.mxu0 %v197
    %538 = vmatpush1.bf16.msra.mxu0 %v196
    %539 = vmatprep.subr.bf16.mxu0 %v201
    %540 = vmatpush1.bf16.msra.mxu0 %v200
    %541 = vmatprep.subr.bf16.mxu0 %v205
    %542 = vmatpush1.bf16.msra.mxu0 %v204
    %543 = vmatprep.subr.bf16.mxu0 %v209
    %544 = vmatpush1.bf16.msra.mxu0 %v208
    %545 = vmatprep.subr.bf16.mxu0 %v213
    %546 = vmatpush1.bf16.msra.mxu0 %v212
    %547 = vmatprep.subr.bf16.mxu0 %v217
    %548 = vmatpush1.bf16.msra.mxu0 %v216
    %549 = vmatprep.subr.bf16.mxu0 %v221
    %550 = vmatpush1.bf16.msra.mxu0 %v220
    %551 = vmatprep.subr.bf16.mxu0 %v225
    %552 = vmatpush1.bf16.msra.mxu0 %v224
    %553 = vmatprep.subr.bf16.mxu0 0
    %554 = vmatpush1.bf16.msra.mxu0 0
    %555 = vmatprep.subr.bf16.mxu0 0
    %556 = vmatpush1.bf16.msra.mxu0 0
    %557 = vmatprep.subr.bf16.mxu0 0
    %558 = vmatpush1.bf16.msra.mxu0 0
    %559 = vmatprep.subr.bf16.mxu0 0
    %560 = vmatpush1.bf16.msra.mxu0 0
    %561 = vmatprep.subr.bf16.mxu0 0
    %562 = vmatpush1.bf16.msra.mxu0 0
    %563 = vmatprep.subr.bf16.mxu0 0
    %564 = vmatpush1.bf16.msra.mxu0 0
    %565 = vmatprep.subr.bf16.mxu0 0
    %566 = vmatpush1.bf16.msra.mxu0 0
    %567 = vmatprep.subr.bf16.mxu0 0
    %568 = vmatpush1.bf16.msra.mxu0 0
    %569 = vmatprep.mubr.bf16.mxu0 0
    %570 = vmatmul.mubr.bf16.gmra.mrb[0].mxu0 %v495
    %v571 = vpop.f32.mrb[0].mxu0
    %v572 = vadd.f32 0.0, %v571
    %v573 = vpop.f32.mrb[0].mxu0
    %v574 = vadd.f32 0.0, %v573
    %v575 = vpop.f32.mrb[0].mxu0
    %v576 = vpop.f32.mrb[0].mxu0
    %577 = vdwg.mxu0
    %v578 = vadd.f32 %v491, %v531
    %v579 = vadd.f32 %v492, %v533
    %v580 = vadd.f32 %v493, %v572
    %v581 = vadd.f32 %v494, %v574
    %v582 = vxor.u32 %v578, 2147483648
    %v583 = vxor.u32 %v579, 2147483648
    %v584 = vxor.u32 %v580, 2147483648
    %v585 = vmul.f32 %v582, 1.442695
    %v586 = vpow.pop %v585
    %v587 = vmul.f32 %v583, 1.442695
    %v588 = vpow.pop %v587
    %v589 = vmul.f32 %v584, 1.442695
    %v590 = vpow.pop %v589
    %v591 = vadd.f32 %v586, 1.0
    %v592 = vadd.f32 %v588, 1.0
    %v593 = vadd.f32 %v590, 1.0
    %v594 = vrcp.pop %v591
    %v595 = vmul.f32 1.0, %v594
    %v596 = vrcp.pop %v592
    %v597 = vmul.f32 1.0, %v596
    %v598 = vrcp.pop %v593
    %v599 = vmul.f32 1.0, %v598
    %v600 = vtanh.pop %v581
    %v601 = vmul.f32 %v597, %v484
    %v602 = vmul.f32 %v595, %v600
    %v603 = vadd.f32 %v601, %v602
    %v604 = vtanh.pop %v603
    %v605 = vmul.f32 %v599, %v604
    %v606 = vadd.f32 %v487, %v605
    %s607 = scalar_lea.vmem [#allocation2], 48
    %v608 = vld [vmem:[%s607] sm:$0xff]
    %v609 = vld [vmem:[%s607 + $0x8] sm:$0xff]
    %v610 = vunpack.c.l.bf16 %v608
    %v611 = vunpack.c.h.bf16 %v608
    %v612 = vunpack.c.l.bf16 %v609
    %v613 = vunpack.c.h.bf16 %v609
    %v614 = vpack.c.bf16 %v605, %v605
    %615 = vmatprep.subr.bf16.mxu0 %v195
    %616 = vmatpush1.bf16.msra.mxu0 %v194
    %617 = vmatprep.subr.bf16.mxu0 %v199
    %618 = vmatpush1.bf16.msra.mxu0 %v198
    %619 = vmatprep.subr.bf16.mxu0 %v203
    %620 = vmatpush1.bf16.msra.mxu0 %v202
    %621 = vmatprep.subr.bf16.mxu0 %v207
    %622 = vmatpush1.bf16.msra.mxu0 %v206
    %623 = vmatprep.subr.bf16.mxu0 %v211
    %624 = vmatpush1.bf16.msra.mxu0 %v210
    %625 = vmatprep.subr.bf16.mxu0 %v215
    %626 = vmatpush1.bf16.msra.mxu0 %v214
    %627 = vmatprep.subr.bf16.mxu0 %v219
    %628 = vmatpush1.bf16.msra.mxu0 %v218
    %629 = vmatprep.subr.bf16.mxu0 %v223
    %630 = vmatpush1.bf16.msra.mxu0 %v222
    %631 = vmatprep.subr.bf16.mxu0 0
    %632 = vmatpush1.bf16.msra.mxu0 0
    %633 = vmatprep.subr.bf16.mxu0 0
    %634 = vmatpush1.bf16.msra.mxu0 0
    %635 = vmatprep.subr.bf16.mxu0 0
    %636 = vmatpush1.bf16.msra.mxu0 0
    %637 = vmatprep.subr.bf16.mxu0 0
    %638 = vmatpush1.bf16.msra.mxu0 0
    %639 = vmatprep.subr.bf16.mxu0 0
    %640 = vmatpush1.bf16.msra.mxu0 0
    %641 = vmatprep.subr.bf16.mxu0 0
    %642 = vmatpush1.bf16.msra.mxu0 0
    %643 = vmatprep.subr.bf16.mxu0 0
    %644 = vmatpush1.bf16.msra.mxu0 0
    %645 = vmatprep.subr.bf16.mxu0 0
    %646 = vmatpush1.bf16.msra.mxu0 0
    %647 = vmatprep.mubr.bf16.mxu0 0
    %648 = vmatmul.mubr.bf16.gmra.mrb[0].mxu0 %v614
    %v649 = vpop.f32.mrb[0].mxu0
    %v650 = vadd.f32 0.0, %v649
    %v651 = vpop.f32.mrb[0].mxu0
    %v652 = vadd.f32 0.0, %v651
    %v653 = vpop.f32.mrb[0].mxu0
    %v654 = vpop.f32.mrb[0].mxu0
    %655 = vdwg.mxu0
    %656 = vmatprep.subr.bf16.mxu0 %v197
    %657 = vmatpush1.bf16.msra.mxu0 %v196
    %658 = vmatprep.subr.bf16.mxu0 %v201
    %659 = vmatpush1.bf16.msra.mxu0 %v200
    %660 = vmatprep.subr.bf16.mxu0 %v205
    %661 = vmatpush1.bf16.msra.mxu0 %v204
    %662 = vmatprep.subr.bf16.mxu0 %v209
    %663 = vmatpush1.bf16.msra.mxu0 %v208
    %664 = vmatprep.subr.bf16.mxu0 %v213
    %665 = vmatpush1.bf16.msra.mxu0 %v212
    %666 = vmatprep.subr.bf16.mxu0 %v217
    %667 = vmatpush1.bf16.msra.mxu0 %v216
    %668 = vmatprep.subr.bf16.mxu0 %v221
    %669 = vmatpush1.bf16.msra.mxu0 %v220
    %670 = vmatprep.subr.bf16.mxu0 %v225
    %671 = vmatpush1.bf16.msra.mxu0 %v224
    %672 = vmatprep.subr.bf16.mxu0 0
    %673 = vmatpush1.bf16.msra.mxu0 0
    %674 = vmatprep.subr.bf16.mxu0 0
    %675 = vmatpush1.bf16.msra.mxu0 0
    %676 = vmatprep.subr.bf16.mxu0 0
    %677 = vmatpush1.bf16.msra.mxu0 0
    %678 = vmatprep.subr.bf16.mxu0 0
    %679 = vmatpush1.bf16.msra.mxu0 0
    %680 = vmatprep.subr.bf16.mxu0 0
    %681 = vmatpush1.bf16.msra.mxu0 0
    %682 = vmatprep.subr.bf16.mxu0 0
    %683 = vmatpush1.bf16.msra.mxu0 0
    %684 = vmatprep.subr.bf16.mxu0 0
    %685 = vmatpush1.bf16.msra.mxu0 0
    %686 = vmatprep.subr.bf16.mxu0 0
    %687 = vmatpush1.bf16.msra.mxu0 0
    %688 = vmatprep.mubr.bf16.mxu0 0
    %689 = vmatmul.mubr.bf16.gmra.mrb[0].mxu0 %v614
    %v690 = vpop.f32.mrb[0].mxu0
    %v691 = vadd.f32 0.0, %v690
    %v692 = vpop.f32.mrb[0].mxu0
    %v693 = vadd.f32 0.0, %v692
    %v694 = vpop.f32.mrb[0].mxu0
    %v695 = vpop.f32.mrb[0].mxu0
    %696 = vdwg.mxu0
    %v697 = vadd.f32 %v610, %v650
    %v698 = vadd.f32 %v611, %v652
    %v699 = vadd.f32 %v612, %v691
    %v700 = vadd.f32 %v613, %v693
    %v701 = vxor.u32 %v697, 2147483648
    %v702 = vxor.u32 %v698, 2147483648
    %v703 = vxor.u32 %v699, 2147483648
    %v704 = vmul.f32 %v701, 1.442695
    %v705 = vpow.pop %v704
    %v706 = vmul.f32 %v702, 1.442695
    %v707 = vpow.pop %v706
    %v708 = vmul.f32 %v703, 1.442695
    %v709 = vpow.pop %v708
    %v710 = vadd.f32 %v705, 1.0
    %v711 = vadd.f32 %v707, 1.0
    %v712 = vadd.f32 %v709, 1.0
    %v713 = vrcp.pop %v710
    %v714 = vmul.f32 1.0, %v713
    %v715 = vrcp.pop %v711
    %v716 = vmul.f32 1.0, %v715
    %v717 = vrcp.pop %v712
    %v718 = vmul.f32 1.0, %v717
    %v719 = vtanh.pop %v700
    %v720 = vmul.f32 %v716, %v603
    %v721 = vmul.f32 %v714, %v719
    %v722 = vadd.f32 %v720, %v721
    %v723 = vtanh.pop %v722
    %v724 = vmul.f32 %v718, %v723
    %v725 = vadd.f32 %v606, %v724
    %s726 = scalar_lea.vmem [#allocation2], 64
    %v727 = vld [vmem:[%s726] sm:$0xff]
    %v728 = vld [vmem:[%s726 + $0x8] sm:$0xff]
    %v729 = vunpack.c.l.bf16 %v727
    %v730 = vunpack.c.h.bf16 %v727
    %v731 = vunpack.c.l.bf16 %v728
    %v732 = vunpack.c.h.bf16 %v728
    %v733 = vpack.c.bf16 %v724, %v724
    %734 = vmatprep.subr.bf16.mxu0 %v195
    %735 = vmatpush1.bf16.msra.mxu0 %v194
    %736 = vmatprep.subr.bf16.mxu0 %v199
    %737 = vmatpush1.bf16.msra.mxu0 %v198
    %738 = vmatprep.subr.bf16.mxu0 %v203
    %739 = vmatpush1.bf16.msra.mxu0 %v202
    %740 = vmatprep.subr.bf16.mxu0 %v207
    %741 = vmatpush1.bf16.msra.mxu0 %v206
    %742 = vmatprep.subr.bf16.mxu0 %v211
    %743 = vmatpush1.bf16.msra.mxu0 %v210
    %744 = vmatprep.subr.bf16.mxu0 %v215
    %745 = vmatpush1.bf16.msra.mxu0 %v214
    %746 = vmatprep.subr.bf16.mxu0 %v219
    %747 = vmatpush1.bf16.msra.mxu0 %v218
    %748 = vmatprep.subr.bf16.mxu0 %v223
    %749 = vmatpush1.bf16.msra.mxu0 %v222
    %750 = vmatprep.subr.bf16.mxu0 0
    %751 = vmatpush1.bf16.msra.mxu0 0
    %752 = vmatprep.subr.bf16.mxu0 0
    %753 = vmatpush1.bf16.msra.mxu0 0
    %754 = vmatprep.subr.bf16.mxu0 0
    %755 = vmatpush1.bf16.msra.mxu0 0
    %756 = vmatprep.subr.bf16.mxu0 0
    %757 = vmatpush1.bf16.msra.mxu0 0
    %758 = vmatprep.subr.bf16.mxu0 0
    %759 = vmatpush1.bf16.msra.mxu0 0
    %760 = vmatprep.subr.bf16.mxu0 0
    %761 = vmatpush1.bf16.msra.mxu0 0
    %762 = vmatprep.subr.bf16.mxu0 0
    %763 = vmatpush1.bf16.msra.mxu0 0
    %764 = vmatprep.subr.bf16.mxu0 0
    %765 = vmatpush1.bf16.msra.mxu0 0
    %766 = vmatprep.mubr.bf16.mxu0 0
    %767 = vmatmul.mubr.bf16.gmra.mrb[0].mxu0 %v733
    %v768 = vpop.f32.mrb[0].mxu0
    %v769 = vadd.f32 0.0, %v768
    %v770 = vpop.f32.mrb[0].mxu0
    %v771 = vadd.f32 0.0, %v770
    %v772 = vpop.f32.mrb[0].mxu0
    %v773 = vpop.f32.mrb[0].mxu0
    %774 = vdwg.mxu0
    %775 = vmatprep.subr.bf16.mxu0 %v197
    %776 = vmatpush1.bf16.msra.mxu0 %v196
    %777 = vmatprep.subr.bf16.mxu0 %v201
    %778 = vmatpush1.bf16.msra.mxu0 %v200
    %779 = vmatprep.subr.bf16.mxu0 %v205
    %780 = vmatpush1.bf16.msra.mxu0 %v204
    %781 = vmatprep.subr.bf16.mxu0 %v209
    %782 = vmatpush1.bf16.msra.mxu0 %v208
    %783 = vmatprep.subr.bf16.mxu0 %v213
    %784 = vmatpush1.bf16.msra.mxu0 %v212
    %785 = vmatprep.subr.bf16.mxu0 %v217
    %786 = vmatpush1.bf16.msra.mxu0 %v216
    %787 = vmatprep.subr.bf16.mxu0 %v221
    %788 = vmatpush1.bf16.msra.mxu0 %v220
    %789 = vmatprep.subr.bf16.mxu0 %v225
    %790 = vmatpush1.bf16.msra.mxu0 %v224
    %791 = vmatprep.subr.bf16.mxu0 0
    %792 = vmatpush1.bf16.msra.mxu0 0
    %793 = vmatprep.subr.bf16.mxu0 0
    %794 = vmatpush1.bf16.msra.mxu0 0
    %795 = vmatprep.subr.bf16.mxu0 0
    %796 = vmatpush1.bf16.msra.mxu0 0
    %797 = vmatprep.subr.bf16.mxu0 0
    %798 = vmatpush1.bf16.msra.mxu0 0
    %799 = vmatprep.subr.bf16.mxu0 0
    %800 = vmatpush1.bf16.msra.mxu0 0
    %801 = vmatprep.subr.bf16.mxu0 0
    %802 = vmatpush1.bf16.msra.mxu0 0
    %803 = vmatprep.subr.bf16.mxu0 0
    %804 = vmatpush1.bf16.msra.mxu0 0
    %805 = vmatprep.subr.bf16.mxu0 0
    %806 = vmatpush1.bf16.msra.mxu0 0
    %807 = vmatprep.mubr.bf16.mxu0 0
    %808 = vmatmul.mubr.bf16.gmra.mrb[0].mxu0 %v733
    %v809 = vpop.f32.mrb[0].mxu0
    %v810 = vadd.f32 0.0, %v809
    %v811 = vpop.f32.mrb[0].mxu0
    %v812 = vadd.f32 0.0, %v811
    %v813 = vpop.f32.mrb[0].mxu0
    %v814 = vpop.f32.mrb[0].mxu0
    %815 = vdwg.mxu0
    %v816 = vadd.f32 %v729, %v769
    %v817 = vadd.f32 %v730, %v771
    %v818 = vadd.f32 %v731, %v810
    %v819 = vadd.f32 %v732, %v812
    %v820 = vxor.u32 %v816, 2147483648
    %v821 = vxor.u32 %v817, 2147483648
    %v822 = vxor.u32 %v818, 2147483648
    %v823 = vmul.f32 %v820, 1.442695
    %v824 = vpow.pop %v823
    %v825 = vmul.f32 %v821, 1.442695
    %v826 = vpow.pop %v825
    %v827 = vmul.f32 %v822, 1.442695
    %v828 = vpow.pop %v827
    %v829 = vadd.f32 %v824, 1.0
    %v830 = vadd.f32 %v826, 1.0
    %v831 = vadd.f32 %v828, 1.0
    %v832 = vrcp.pop %v829
    %v833 = vmul.f32 1.0, %v832
    %v834 = vrcp.pop %v830
    %v835 = vmul.f32 1.0, %v834
    %v836 = vrcp.pop %v831
    %v837 = vmul.f32 1.0, %v836
    %v838 = vtanh.pop %v819
    %v839 = vmul.f32 %v835, %v722
    %v840 = vmul.f32 %v833, %v838
    %v841 = vadd.f32 %v839, %v840
    %v842 = vtanh.pop %v841
    %v843 = vmul.f32 %v837, %v842
    %v844 = vadd.f32 %v725, %v843
    %s845 = scalar_lea.vmem [#allocation2], 80
    %v846 = vld [vmem:[%s845] sm:$0xff]
    %v847 = vld [vmem:[%s845 + $0x8] sm:$0xff]
    %v848 = vunpack.c.l.bf16 %v846
    %v849 = vunpack.c.h.bf16 %v846
    %v850 = vunpack.c.l.bf16 %v847
    %v851 = vunpack.c.h.bf16 %v847
    %v852 = vpack.c.bf16 %v843, %v843
    %853 = vmatprep.subr.bf16.mxu0 %v195
    %854 = vmatpush1.bf16.msra.mxu0 %v194
    %855 = vmatprep.subr.bf16.mxu0 %v199
    %856 = vmatpush1.bf16.msra.mxu0 %v198
    %857 = vmatprep.subr.bf16.mxu0 %v203
    %858 = vmatpush1.bf16.msra.mxu0 %v202
    %859 = vmatprep.subr.bf16.mxu0 %v207
    %860 = vmatpush1.bf16.msra.mxu0 %v206
    %861 = vmatprep.subr.bf16.mxu0 %v211
    %862 = vmatpush1.bf16.msra.mxu0 %v210
    %863 = vmatprep.subr.bf16.mxu0 %v215
    %864 = vmatpush1.bf16.msra.mxu0 %v214
    %865 = vmatprep.subr.bf16.mxu0 %v219
    %866 = vmatpush1.bf16.msra.mxu0 %v218
    %867 = vmatprep.subr.bf16.mxu0 %v223
    %868 = vmatpush1.bf16.msra.mxu0 %v222
    %869 = vmatprep.subr.bf16.mxu0 0
    %870 = vmatpush1.bf16.msra.mxu0 0
    %871 = vmatprep.subr.bf16.mxu0 0
    %872 = vmatpush1.bf16.msra.mxu0 0
    %873 = vmatprep.subr.bf16.mxu0 0
    %874 = vmatpush1.bf16.msra.mxu0 0
    %875 = vmatprep.subr.bf16.mxu0 0
    %876 = vmatpush1.bf16.msra.mxu0 0
    %877 = vmatprep.subr.bf16.mxu0 0
    %878 = vmatpush1.bf16.msra.mxu0 0
    %879 = vmatprep.subr.bf16.mxu0 0
    %880 = vmatpush1.bf16.msra.mxu0 0
    %881 = vmatprep.subr.bf16.mxu0 0
    %882 = vmatpush1.bf16.msra.mxu0 0
    %883 = vmatprep.subr.bf16.mxu0 0
    %884 = vmatpush1.bf16.msra.mxu0 0
    %885 = vmatprep.mubr.bf16.mxu0 0
    %886 = vmatmul.mubr.bf16.gmra.mrb[0].mxu0 %v852
    %v887 = vpop.f32.mrb[0].mxu0
    %v888 = vadd.f32 0.0, %v887
    %v889 = vpop.f32.mrb[0].mxu0
    %v890 = vadd.f32 0.0, %v889
    %v891 = vpop.f32.mrb[0].mxu0
    %v892 = vpop.f32.mrb[0].mxu0
    %893 = vdwg.mxu0
    %894 = vmatprep.subr.bf16.mxu0 %v197
    %895 = vmatpush1.bf16.msra.mxu0 %v196
    %896 = vmatprep.subr.bf16.mxu0 %v201
    %897 = vmatpush1.bf16.msra.mxu0 %v200
    %898 = vmatprep.subr.bf16.mxu0 %v205
    %899 = vmatpush1.bf16.msra.mxu0 %v204
    %900 = vmatprep.subr.bf16.mxu0 %v209
    %901 = vmatpush1.bf16.msra.mxu0 %v208
    %902 = vmatprep.subr.bf16.mxu0 %v213
    %903 = vmatpush1.bf16.msra.mxu0 %v212
    %904 = vmatprep.subr.bf16.mxu0 %v217
    %905 = vmatpush1.bf16.msra.mxu0 %v216
    %906 = vmatprep.subr.bf16.mxu0 %v221
    %907 = vmatpush1.bf16.msra.mxu0 %v220
    %908 = vmatprep.subr.bf16.mxu0 %v225
    %909 = vmatpush1.bf16.msra.mxu0 %v224
    %910 = vmatprep.subr.bf16.mxu0 0
    %911 = vmatpush1.bf16.msra.mxu0 0
    %912 = vmatprep.subr.bf16.mxu0 0
    %913 = vmatpush1.bf16.msra.mxu0 0
    %914 = vmatprep.subr.bf16.mxu0 0
    %915 = vmatpush1.bf16.msra.mxu0 0
    %916 = vmatprep.subr.bf16.mxu0 0
    %917 = vmatpush1.bf16.msra.mxu0 0
    %918 = vmatprep.subr.bf16.mxu0 0
    %919 = vmatpush1.bf16.msra.mxu0 0
    %920 = vmatprep.subr.bf16.mxu0 0
    %921 = vmatpush1.bf16.msra.mxu0 0
    %922 = vmatprep.subr.bf16.mxu0 0
    %923 = vmatpush1.bf16.msra.mxu0 0
    %924 = vmatprep.subr.bf16.mxu0 0
    %925 = vmatpush1.bf16.msra.mxu0 0
    %926 = vmatprep.mubr.bf16.mxu0 0
    %927 = vmatmul.mubr.bf16.gmra.mrb[0].mxu0 %v852
    %v928 = vpop.f32.mrb[0].mxu0
    %v929 = vadd.f32 0.0, %v928
    %v930 = vpop.f32.mrb[0].mxu0
    %v931 = vadd.f32 0.0, %v930
    %v932 = vpop.f32.mrb[0].mxu0
    %v933 = vpop.f32.mrb[0].mxu0
    %934 = vdwg.mxu0
    %v935 = vadd.f32 %v848, %v888
    %v936 = vadd.f32 %v849, %v890
    %v937 = vadd.f32 %v850, %v929
    %v938 = vadd.f32 %v851, %v931
    %v939 = vxor.u32 %v935, 2147483648
    %v940 = vxor.u32 %v936, 2147483648
    %v941 = vxor.u32 %v937, 2147483648
    %v942 = vmul.f32 %v939, 1.442695
    %v943 = vpow.pop %v942
    %v944 = vmul.f32 %v940, 1.442695
    %v945 = vpow.pop %v944
    %v946 = vmul.f32 %v941, 1.442695
    %v947 = vpow.pop %v946
    %v948 = vadd.f32 %v943, 1.0
    %v949 = vadd.f32 %v945, 1.0
    %v950 = vadd.f32 %v947, 1.0
    %v951 = vrcp.pop %v948
    %v952 = vmul.f32 1.0, %v951
    %v953 = vrcp.pop %v949
    %v954 = vmul.f32 1.0, %v953
    %v955 = vrcp.pop %v950
    %v956 = vmul.f32 1.0, %v955
    %v957 = vtanh.pop %v938
    %v958 = vmul.f32 %v954, %v841
    %v959 = vmul.f32 %v952, %v957
    %v960 = vadd.f32 %v958, %v959
    %v961 = vtanh.pop %v960
    %v962 = vmul.f32 %v956, %v961
    %v963 = vadd.f32 %v844, %v962
    %s964 = scalar_lea.vmem [#allocation2], 96
    %v965 = vld [vmem:[%s964] sm:$0xff]
    %v966 = vld [vmem:[%s964 + $0x8] sm:$0xff]
    %v967 = vunpack.c.l.bf16 %v965
    %v968 = vunpack.c.h.bf16 %v965
    %v969 = vunpack.c.l.bf16 %v966
    %v970 = vunpack.c.h.bf16 %v966
    %v971 = vpack.c.bf16 %v962, %v962
    %972 = vmatprep.subr.bf16.mxu0 %v195
    %973 = vmatpush1.bf16.msra.mxu0 %v194
    %974 = vmatprep.subr.bf16.mxu0 %v199
    %975 = vmatpush1.bf16.msra.mxu0 %v198
    %976 = vmatprep.subr.bf16.mxu0 %v203
    %977 = vmatpush1.bf16.msra.mxu0 %v202
    %978 = vmatprep.subr.bf16.mxu0 %v207
    %979 = vmatpush1.bf16.msra.mxu0 %v206
    %980 = vmatprep.subr.bf16.mxu0 %v211
    %981 = vmatpush1.bf16.msra.mxu0 %v210
    %982 = vmatprep.subr.bf16.mxu0 %v215
    %983 = vmatpush1.bf16.msra.mxu0 %v214
    %984 = vmatprep.subr.bf16.mxu0 %v219
    %985 = vmatpush1.bf16.msra.mxu0 %v218
    %986 = vmatprep.subr.bf16.mxu0 %v223
    %987 = vmatpush1.bf16.msra.mxu0 %v222
    %988 = vmatprep.subr.bf16.mxu0 0
    %989 = vmatpush1.bf16.msra.mxu0 0
    %990 = vmatprep.subr.bf16.mxu0 0
    %991 = vmatpush1.bf16.msra.mxu0 0
    %992 = vmatprep.subr.bf16.mxu0 0
    %993 = vmatpush1.bf16.msra.mxu0 0
    %994 = vmatprep.subr.bf16.mxu0 0
    %995 = vmatpush1.bf16.msra.mxu0 0
    %996 = vmatprep.subr.bf16.mxu0 0
    %997 = vmatpush1.bf16.msra.mxu0 0
    %998 = vmatprep.subr.bf16.mxu0 0
    %999 = vmatpush1.bf16.msra.mxu0 0
    %1000 = vmatprep.subr.bf16.mxu0 0
    %1001 = vmatpush1.bf16.msra.mxu0 0
    %1002 = vmatprep.subr.bf16.mxu0 0
    %1003 = vmatpush1.bf16.msra.mxu0 0
    %1004 = vmatprep.mubr.bf16.mxu0 0
    %1005 = vmatmul.mubr.bf16.gmra.mrb[0].mxu0 %v971
    %v1006 = vpop.f32.mrb[0].mxu0
    %v1007 = vadd.f32 0.0, %v1006
    %v1008 = vpop.f32.mrb[0].mxu0
    %v1009 = vadd.f32 0.0, %v1008
    %v1010 = vpop.f32.mrb[0].mxu0
    %v1011 = vpop.f32.mrb[0].mxu0
    %1012 = vdwg.mxu0
    %1013 = vmatprep.subr.bf16.mxu0 %v197
    %1014 = vmatpush1.bf16.msra.mxu0 %v196
    %1015 = vmatprep.subr.bf16.mxu0 %v201
    %1016 = vmatpush1.bf16.msra.mxu0 %v200
    %1017 = vmatprep.subr.bf16.mxu0 %v205
    %1018 = vmatpush1.bf16.msra.mxu0 %v204
    %1019 = vmatprep.subr.bf16.mxu0 %v209
    %1020 = vmatpush1.bf16.msra.mxu0 %v208
    %1021 = vmatprep.subr.bf16.mxu0 %v213
    %1022 = vmatpush1.bf16.msra.mxu0 %v212
    %1023 = vmatprep.subr.bf16.mxu0 %v217
    %1024 = vmatpush1.bf16.msra.mxu0 %v216
    %1025 = vmatprep.subr.bf16.mxu0 %v221
    %1026 = vmatpush1.bf16.msra.mxu0 %v220
    %1027 = vmatprep.subr.bf16.mxu0 %v225
    %1028 = vmatpush1.bf16.msra.mxu0 %v224
    %1029 = vmatprep.subr.bf16.mxu0 0
    %1030 = vmatpush1.bf16.msra.mxu0 0
    %1031 = vmatprep.subr.bf16.mxu0 0
    %1032 = vmatpush1.bf16.msra.mxu0 0
    %1033 = vmatprep.subr.bf16.mxu0 0
    %1034 = vmatpush1.bf16.msra.mxu0 0
    %1035 = vmatprep.subr.bf16.mxu0 0
    %1036 = vmatpush1.bf16.msra.mxu0 0
    %1037 = vmatprep.subr.bf16.mxu0 0
    %1038 = vmatpush1.bf16.msra.mxu0 0
    %1039 = vmatprep.subr.bf16.mxu0 0
    %1040 = vmatpush1.bf16.msra.mxu0 0
    %1041 = vmatprep.subr.bf16.mxu0 0
    %1042 = vmatpush1.bf16.msra.mxu0 0
    %1043 = vmatprep.subr.bf16.mxu0 0
    %1044 = vmatpush1.bf16.msra.mxu0 0
    %1045 = vmatprep.mubr.bf16.mxu0 0
    %1046 = vmatmul.mubr.bf16.gmra.mrb[0].mxu0 %v971
    %v1047 = vpop.f32.mrb[0].mxu0
    %v1048 = vadd.f32 0.0, %v1047
    %v1049 = vpop.f32.mrb[0].mxu0
    %v1050 = vadd.f32 0.0, %v1049
    %v1051 = vpop.f32.mrb[0].mxu0
    %v1052 = vpop.f32.mrb[0].mxu0
    %1053 = vdwg.mxu0
    %v1054 = vadd.f32 %v967, %v1007
    %v1055 = vadd.f32 %v968, %v1009
    %v1056 = vadd.f32 %v969, %v1048
    %v1057 = vadd.f32 %v970, %v1050
    %v1058 = vxor.u32 %v1054, 2147483648
    %v1059 = vxor.u32 %v1055, 2147483648
    %v1060 = vxor.u32 %v1056, 2147483648
    %v1061 = vmul.f32 %v1058, 1.442695
    %v1062 = vpow.pop %v1061
    %v1063 = vmul.f32 %v1059, 1.442695
    %v1064 = vpow.pop %v1063
    %v1065 = vmul.f32 %v1060, 1.442695
    %v1066 = vpow.pop %v1065
    %v1067 = vadd.f32 %v1062, 1.0
    %v1068 = vadd.f32 %v1064, 1.0
    %v1069 = vadd.f32 %v1066, 1.0
    %v1070 = vrcp.pop %v1067
    %v1071 = vmul.f32 1.0, %v1070
    %v1072 = vrcp.pop %v1068
    %v1073 = vmul.f32 1.0, %v1072
    %v1074 = vrcp.pop %v1069
    %v1075 = vmul.f32 1.0, %v1074
    %v1076 = vtanh.pop %v1057
    %v1077 = vmul.f32 %v1073, %v960
    %v1078 = vmul.f32 %v1071, %v1076
    %v1079 = vadd.f32 %v1077, %v1078
    %v1080 = vtanh.pop %v1079
    %v1081 = vmul.f32 %v1075, %v1080
    %v1082 = vadd.f32 %v963, %v1081
    %s1083 = scalar_lea.vmem [#allocation2], 112
    %v1084 = vld [vmem:[%s1083] sm:$0xff]
    %v1085 = vld [vmem:[%s1083 + $0x8] sm:$0xff]
    %v1086 = vunpack.c.l.bf16 %v1084
    %v1087 = vunpack.c.h.bf16 %v1084
    %v1088 = vunpack.c.l.bf16 %v1085
    %v1089 = vunpack.c.h.bf16 %v1085
    %v1090 = vpack.c.bf16 %v1081, %v1081
    %1091 = vmatprep.subr.bf16.mxu0 %v195
    %1092 = vmatpush1.bf16.msra.mxu0 %v194
    %1093 = vmatprep.subr.bf16.mxu0 %v199
    %1094 = vmatpush1.bf16.msra.mxu0 %v198
    %1095 = vmatprep.subr.bf16.mxu0 %v203
    %1096 = vmatpush1.bf16.msra.mxu0 %v202
    %1097 = vmatprep.subr.bf16.mxu0 %v207
    %1098 = vmatpush1.bf16.msra.mxu0 %v206
    %1099 = vmatprep.subr.bf16.mxu0 %v211
    %1100 = vmatpush1.bf16.msra.mxu0 %v210
    %1101 = vmatprep.subr.bf16.mxu0 %v215
    %1102 = vmatpush1.bf16.msra.mxu0 %v214
    %1103 = vmatprep.subr.bf16.mxu0 %v219
    %1104 = vmatpush1.bf16.msra.mxu0 %v218
    %1105 = vmatprep.subr.bf16.mxu0 %v223
    %1106 = vmatpush1.bf16.msra.mxu0 %v222
    %1107 = vmatprep.subr.bf16.mxu0 0
    %1108 = vmatpush1.bf16.msra.mxu0 0
    %1109 = vmatprep.subr.bf16.mxu0 0
    %1110 = vmatpush1.bf16.msra.mxu0 0
    %1111 = vmatprep.subr.bf16.mxu0 0
    %1112 = vmatpush1.bf16.msra.mxu0 0
    %1113 = vmatprep.subr.bf16.mxu0 0
    %1114 = vmatpush1.bf16.msra.mxu0 0
    %1115 = vmatprep.subr.bf16.mxu0 0
    %1116 = vmatpush1.bf16.msra.mxu0 0
    %1117 = vmatprep.subr.bf16.mxu0 0
    %1118 = vmatpush1.bf16.msra.mxu0 0
    %1119 = vmatprep.subr.bf16.mxu0 0
    %1120 = vmatpush1.bf16.msra.mxu0 0
    %1121 = vmatprep.subr.bf16.mxu0 0
    %1122 = vmatpush1.bf16.msra.mxu0 0
    %1123 = vmatprep.mubr.bf16.mxu0 0
    %1124 = vmatmul.mubr.bf16.gmra.mrb[0].mxu0 %v1090
    %v1125 = vpop.f32.mrb[0].mxu0
    %v1126 = vadd.f32 0.0, %v1125
    %v1127 = vpop.f32.mrb[0].mxu0
    %v1128 = vadd.f32 0.0, %v1127
    %v1129 = vpop.f32.mrb[0].mxu0
    %v1130 = vpop.f32.mrb[0].mxu0
    %1131 = vdwg.mxu0
    %1132 = vmatprep.subr.bf16.mxu0 %v197
    %1133 = vmatpush1.bf16.msra.mxu0 %v196
    %1134 = vmatprep.subr.bf16.mxu0 %v201
    %1135 = vmatpush1.bf16.msra.mxu0 %v200
    %1136 = vmatprep.subr.bf16.mxu0 %v205
    %1137 = vmatpush1.bf16.msra.mxu0 %v204
    %1138 = vmatprep.subr.bf16.mxu0 %v209
    %1139 = vmatpush1.bf16.msra.mxu0 %v208
    %1140 = vmatprep.subr.bf16.mxu0 %v213
    %1141 = vmatpush1.bf16.msra.mxu0 %v212
    %1142 = vmatprep.subr.bf16.mxu0 %v217
    %1143 = vmatpush1.bf16.msra.mxu0 %v216
    %1144 = vmatprep.subr.bf16.mxu0 %v221
    %1145 = vmatpush1.bf16.msra.mxu0 %v220
    %1146 = vmatprep.subr.bf16.mxu0 %v225
    %1147 = vmatpush1.bf16.msra.mxu0 %v224
    %1148 = vmatprep.subr.bf16.mxu0 0
    %1149 = vmatpush1.bf16.msra.mxu0 0
    %1150 = vmatprep.subr.bf16.mxu0 0
    %1151 = vmatpush1.bf16.msra.mxu0 0
    %1152 = vmatprep.subr.bf16.mxu0 0
    %1153 = vmatpush1.bf16.msra.mxu0 0
    %1154 = vmatprep.subr.bf16.mxu0 0
    %1155 = vmatpush1.bf16.msra.mxu0 0
    %1156 = vmatprep.subr.bf16.mxu0 0
    %1157 = vmatpush1.bf16.msra.mxu0 0
    %1158 = vmatprep.subr.bf16.mxu0 0
    %1159 = vmatpush1.bf16.msra.mxu0 0
    %1160 = vmatprep.subr.bf16.mxu0 0
    %1161 = vmatpush1.bf16.msra.mxu0 0
    %1162 = vmatprep.subr.bf16.mxu0 0
    %1163 = vmatpush1.bf16.msra.mxu0 0
    %1164 = vmatprep.mubr.bf16.mxu0 0
    %1165 = vmatmul.mubr.bf16.gmra.mrb[0].mxu0 %v1090
    %v1166 = vpop.f32.mrb[0].mxu0
    %v1167 = vadd.f32 0.0, %v1166
    %v1168 = vpop.f32.mrb[0].mxu0
    %v1169 = vadd.f32 0.0, %v1168
    %v1170 = vpop.f32.mrb[0].mxu0
    %v1171 = vpop.f32.mrb[0].mxu0
    %1172 = vdwg.mxu0
    %v1173 = vadd.f32 %v1086, %v1126
    %v1174 = vadd.f32 %v1087, %v1128
    %v1175 = vadd.f32 %v1088, %v1167
    %v1176 = vadd.f32 %v1089, %v1169
    %v1177 = vxor.u32 %v1173, 2147483648
    %v1178 = vxor.u32 %v1174, 2147483648
    %v1179 = vxor.u32 %v1175, 2147483648
    %v1180 = vmul.f32 %v1177, 1.442695
    %v1181 = vpow.pop %v1180
    %v1182 = vmul.f32 %v1178, 1.442695
    %v1183 = vpow.pop %v1182
    %v1184 = vmul.f32 %v1179, 1.442695
    %v1185 = vpow.pop %v1184
    %v1186 = vadd.f32 %v1181, 1.0
    %v1187 = vadd.f32 %v1183, 1.0
    %v1188 = vadd.f32 %v1185, 1.0
    %v1189 = vrcp.pop %v1186
    %v1190 = vmul.f32 1.0, %v1189
    %v1191 = vrcp.pop %v1187
    %v1192 = vmul.f32 1.0, %v1191
    %v1193 = vrcp.pop %v1188
    %v1194 = vmul.f32 1.0, %v1193
    %v1195 = vtanh.pop %v1176
    %v1196 = vmul.f32 %v1192, %v1079
    %v1197 = vmul.f32 %v1190, %v1195
    %v1198 = vadd.f32 %v1196, %v1197
    %v1199 = vtanh.pop %v1198
    %v1200 = vmul.f32 %v1194, %v1199
    %v1201 = vadd.f32 %v1082, %v1200
    %v1202 = vmul.f32 %v1201, 0.125
    %v1203 = vld [vmem:[#allocation7] sm:$0xff]
    %v1204 = vld [vmem:[#allocation7 + $0x8] sm:$0xff]
    %v1205 = vld [vmem:[#allocation7 + $0x10] sm:$0xff]
    %v1206 = vld [vmem:[#allocation7 + $0x18] sm:$0xff]
    %v1207 = vld [vmem:[#allocation7 + $0x20] sm:$0xff]
    %v1208 = vld [vmem:[#allocation7 + $0x28] sm:$0xff]
    %v1209 = vld [vmem:[#allocation7 + $0x30] sm:$0xff]
    %v1210 = vld [vmem:[#allocation7 + $0x38] sm:$0xff]
    %v1211 = vld [vmem:[#allocation7 + $0x40] sm:$0xff]
    %v1212 = vld [vmem:[#allocation7 + $0x48] sm:$0xff]
    %v1213 = vld [vmem:[#allocation7 + $0x50] sm:$0xff]
    %v1214 = vld [vmem:[#allocation7 + $0x58] sm:$0xff]
    %v1215 = vld [vmem:[#allocation7 + $0x60] sm:$0xff]
    %v1216 = vld [vmem:[#allocation7 + $0x68] sm:$0xff]
    %v1217 = vld [vmem:[#allocation7 + $0x70] sm:$0xff]
    %v1218 = vld [vmem:[#allocation7 + $0x78] sm:$0xff]
    %v1219 = vld [vmem:[%s3] sm:$0x1]
    %v1221 = vlaneseq
    %v1222 = vshrl.u32 %v1221, 7
    %v1223 = vsub.s32 0, %v1222
    %v1224 = vrot.slane %v1219, %v1223
    %1226 = vmatprep.subr.mxu0 0.0
    %1227 = vmatpush1.msra.mxu0 %v1203
    %1228 = vmatprep.subr.mxu0 0.0
    %1229 = vmatpush1.msra.mxu0 %v1204
    %1230 = vmatprep.subr.mxu0 0.0
    %1231 = vmatpush1.msra.mxu0 %v1205
    %1232 = vmatprep.subr.mxu0 0.0
    %1233 = vmatpush1.msra.mxu0 %v1206
    %1234 = vmatprep.subr.mxu0 0.0
    %1235 = vmatpush1.msra.mxu0 %v1207
    %1236 = vmatprep.subr.mxu0 0.0
    %1237 = vmatpush1.msra.mxu0 %v1208
    %1238 = vmatprep.subr.mxu0 0.0
    %1239 = vmatpush1.msra.mxu0 %v1209
    %1240 = vmatprep.subr.mxu0 0.0
    %1241 = vmatpush1.msra.mxu0 %v1210
    %1242 = vmatprep.subr.mxu0 0.0
    %1243 = vmatpush1.msra.mxu0 %v1211
    %1244 = vmatprep.subr.mxu0 0.0
    %1245 = vmatpush1.msra.mxu0 %v1212
    %1246 = vmatprep.subr.mxu0 0.0
    %1247 = vmatpush1.msra.mxu0 %v1213
    %1248 = vmatprep.subr.mxu0 0.0
    %1249 = vmatpush1.msra.mxu0 %v1214
    %1250 = vmatprep.subr.mxu0 0.0
    %1251 = vmatpush1.msra.mxu0 %v1215
    %1252 = vmatprep.subr.mxu0 0.0
    %1253 = vmatpush1.msra.mxu0 %v1216
    %1254 = vmatprep.subr.mxu0 0.0
    %1255 = vmatpush1.msra.mxu0 %v1217
    %1256 = vmatprep.subr.mxu0 0.0
    %1257 = vmatpush1.msra.mxu0 %v1218
    %1258 = vmatprep.subr.mxu0 0.0
    %1259 = vmatpush1.msra.mxu0 0.0
    %1260 = vmatprep.subr.mxu0 0.0
    %1261 = vmatpush1.msra.mxu0 0.0
    %1262 = vmatprep.subr.mxu0 0.0
    %1263 = vmatpush1.msra.mxu0 0.0
    %1264 = vmatprep.subr.mxu0 0.0
    %1265 = vmatpush1.msra.mxu0 0.0
    %1266 = vmatprep.subr.mxu0 0.0
    %1267 = vmatpush1.msra.mxu0 0.0
    %1268 = vmatprep.subr.mxu0 0.0
    %1269 = vmatpush1.msra.mxu0 0.0
    %1270 = vmatprep.subr.mxu0 0.0
    %1271 = vmatpush1.msra.mxu0 0.0
    %1272 = vmatprep.subr.mxu0 0.0
    %1273 = vmatpush1.msra.mxu0 0.0
    %1274 = vmatprep.subr.mxu0 0.0
    %1275 = vmatpush1.msra.mxu0 0.0
    %1276 = vmatprep.subr.mxu0 0.0
    %1277 = vmatpush1.msra.mxu0 0.0
    %1278 = vmatprep.subr.mxu0 0.0
    %1279 = vmatpush1.msra.mxu0 0.0
    %1280 = vmatprep.subr.mxu0 0.0
    %1281 = vmatpush1.msra.mxu0 0.0
    %1282 = vmatprep.subr.mxu0 0.0
    %1283 = vmatpush1.msra.mxu0 0.0
    %1284 = vmatprep.subr.mxu0 0.0
    %1285 = vmatpush1.msra.mxu0 0.0
    %1286 = vmatprep.subr.mxu0 0.0
    %1287 = vmatpush1.msra.mxu0 0.0
    %1288 = vmatprep.subr.mxu0 0.0
    %1289 = vmatpush1.msra.mxu0 0.0
    %1290 = vmatprep.mubr.f32.mxu0 0.0
    %1291 = vmatmul.mubr.f32.gmra.mrb[0].mxu0 %v1202
    %v1292 = vpop.f32.mrb[0].mxu0
    %v1293 = vadd.f32 %v1224, %v1292
    %v1294 = vpop.f32.mrb[0].mxu0
    %1295 = vdwg.mxu0
    %1296 = vst [vmem:[#allocation8] sm:$0xff] %v1293
    // Predicated region
    $region30: #{tpu_custom_call.1} parent=1 // pred_check
      _
    $region31: #{tpu_custom_call.1} parent=1 // pred_check_branch
      %1298 = sbr.rel (0) target = $region33
    $region32: #{tpu_custom_call.1} parent=1 // pred_region
      %s1300 = ssub.s32 128, 128
      %1301 = vsyncadd [#allocation4], %s1300
      %s1303 = sshll.u32 [#allocation8], 4
      %s1304 = int_to_ptr.vmem [resolvable:$true] %s1303
      %1306 = dma.vmem_to_hbm [thread:$0]  %s1304, 128, %s4, [#allocation4]
    $region33: #{tpu_custom_call.1} parent=1 // pred_fallthru
      _
    // Predicated region
    $region34: #{tpu_custom_call.1} parent=1 // pred_check
      _
    $region35: #{tpu_custom_call.1} parent=1 // pred_check_branch
      %1308 = sbr.rel (0) target = $region37
    $region36: #{tpu_custom_call.1} parent=1 // pred_region
      %1309 = dma.done [#allocation4], 128
    $region37: #{tpu_custom_call.1} parent=1 // pred_fallthru
      _
    %1310 = vsyncpa [#allocation3], 1
    %1311 = vsyncpa [#allocation6], 1
    %1312 = vsyncpa [#allocation4], 1

</llo_original>
